<compile_context>
chip_gen: v5e
topology: v5e:2x2
jax: 0.10.0
libtpu: 0.0.40
codegen_flags: <defaults>
</compile_context>

<pallas_src>
import math

import jax
import jax.numpy as jnp
from jax import lax
from jax.experimental import pallas as pl
from jax.experimental.pallas import tpu as pltpu

# ---- model hyper-parameters (consistent with the hard-coded reshape to 100) ----
B = 2                 # batch_size
S = 8                 # seq_length
E_IN = 32             # embedding_length (BERT hidden size, qkv_proj input dim)
NUM_HEADS = 4
EMBED_DIM = 100       # embed_dim == hidden_units (required by reshape to ..., 100)
HEAD_DIM = EMBED_DIM // NUM_HEADS   # 25 (real head dim, also the softmax scale's d_k)
HEAD_PAD = 32         # per-head width inside the kernel (zero-padded 25 -> 32)
OPROJ_DIM = 64        # o_proj: Linear(hidden_units, 64)
GRU_HIDDEN = 32
OUTPUT_SIZE = 5

QBLK = NUM_HEADS * HEAD_PAD          # 128: width of each Q / K / V block in fused qkv


def _mhba_kernel(x_ref, wqkv_ref, ow_ref, wih_ref, whh_ref, bg_ref,
                 lw_ref, lb_ref, out_ref):
    """Whole forward in one invocation; every operand is VMEM-resident.

    x_ref    : (S*B, E_IN)    time-major flattened BERT embeddings (row = t*B + b)
    wqkv_ref : (E_IN, 3*QBLK) fused QKV weight, head dim zero-padded 25->32
    ow_ref   : (QBLK, OPROJ_DIM) o_proj weight^T, per-head rows zero-padded
    wih_ref  : (OPROJ_DIM, 3*GRU_HIDDEN)  GRU input weights, gates [r|z|n] fused
    whh_ref  : (GRU_HIDDEN, 3*GRU_HIDDEN) GRU hidden weights, gates fused
    bg_ref   : (2, 3*GRU_HIDDEN)  row0 = b_ih + o_proj.bias @ W_ih (folded), row1 = b_hh
    lw_ref   : (GRU_HIDDEN, OUTPUT_SIZE); lb_ref: (1, OUTPUT_SIZE)
    out_ref  : (B, OUTPUT_SIZE) log-probabilities
    """
    nrows = S * B
    scale = 1.0 / math.sqrt(HEAD_DIM)         # torch uses the real head dim (25)

    x = x_ref[...]                                                         # (16, 32)

    # ---- single fused QKV projection for all heads (one MXU push) ----
    # qkv_proj.bias is fill_(0) in the module, so the bias add is dropped.
    qkv = jnp.dot(x, wqkv_ref[...], preferred_element_type=jnp.float32)    # (16, 384)

    # block-diagonal batch mask: row i = t*B + b may only attend to cols of same b
    rb = lax.broadcasted_iota(jnp.int32, (nrows, nrows), 0) % B
    cb = lax.broadcasted_iota(jnp.int32, (nrows, nrows), 1) % B
    same_batch = rb == cb
    neg = jnp.float32(-1e30)

    vals = []
    for h in range(NUM_HEADS):                                   # 4 heads, unrolled
        q = qkv[:, h * HEAD_PAD:(h + 1) * HEAD_PAD]                        # (16, 32)
        k = qkv[:, QBLK + h * HEAD_PAD:QBLK + (h + 1) * HEAD_PAD]
        v = qkv[:, 2 * QBLK + h * HEAD_PAD:2 * QBLK + (h + 1) * HEAD_PAD]
        logits = jnp.dot(q, k.T, preferred_element_type=jnp.float32) * scale  # (16,16)
        logits = jnp.where(same_batch, logits, neg)
        logits = logits - jnp.max(logits, axis=-1, keepdims=True)
        p = jnp.exp(logits)
        attn = p * pl.reciprocal(jnp.sum(p, axis=-1, keepdims=True), approx=True)
        vals.append(jnp.dot(attn, v, preferred_element_type=jnp.float32))     # (16,32)

    vals_cat = jnp.concatenate(vals, axis=-1)                              # (16, 128)

    # ---- o_proj (bias folded into GRU input bias) + fused GRU input gates ----
    attn_out = jnp.dot(vals_cat, ow_ref[...], preferred_element_type=jnp.float32)  # (16,64)
    gx = (jnp.dot(attn_out, wih_ref[...], preferred_element_type=jnp.float32)
          + bg_ref[0:1, :])                                                # (16, 96)

    whh = whh_ref[...]                                                     # (32, 96)
    bhh = bg_ref[1:2, :]                                                   # (1, 96)
    G = GRU_HIDDEN

    # ---- reverse-direction GRU (only hidden[-1] of the bidirectional GRU reaches
    #      the output, so the forward direction is omitted); 8 steps fully unrolled.
    h = jnp.zeros((B, G), jnp.float32)
    for t in range(S - 1, -1, -1):                 # static unroll; static row slices
        gx_t = gx[t * B:(t + 1) * B, :]                                    # (B, 96)
        gh = jnp.dot(h, whh, preferred_element_type=jnp.float32) + bhh     # (B, 96)
        r = jax.nn.sigmoid(gx_t[:, 0:G] + gh[:, 0:G])
        z = jax.nn.sigmoid(gx_t[:, G:2 * G] + gh[:, G:2 * G])
        n = jnp.tanh(gx_t[:, 2 * G:3 * G] + r * gh[:, 2 * G:3 * G])
        h = (1.0 - z) * n + z * h

    # ---- label Linear + log_softmax ----
    lg = jnp.dot(h, lw_ref[...], preferred_element_type=jnp.float32) + lb_ref[...]  # (B,5)
    m = jnp.max(lg, axis=-1, keepdims=True)
    lse = m + jnp.log(jnp.sum(jnp.exp(lg - m), axis=-1, keepdims=True))
    out_ref[...] = lg - lse


def pack_params(params):
    """Repack module-layout parameters into lane-friendly fused kernel arrays."""
    wq, wk, wv, bq, bk, bv, ow, ob, wih, whh, bih, bhh, lw, lb = params

    def pad_heads(w):   # (H, E_IN, HEAD_DIM) -> (E_IN, H*HEAD_PAD), zero-pad 25->32
        wp = jnp.pad(w, ((0, 0), (0, 0), (0, HEAD_PAD - HEAD_DIM)))
        return jnp.transpose(wp, (1, 0, 2)).reshape(E_IN, NUM_HEADS * HEAD_PAD)

    w_qkv_p = jnp.concatenate([pad_heads(wq), pad_heads(wk), pad_heads(wv)],
                              axis=1)                                   # (32, 384)
    ow_p = jnp.pad(ow, ((0, 0), (0, HEAD_PAD - HEAD_DIM), (0, 0))
                   ).reshape(NUM_HEADS * HEAD_PAD, OPROJ_DIM)           # (128, 64)

    wih_all = jnp.concatenate([wih[0], wih[1], wih[2]], axis=1)         # (64, 96)
    whh_all = jnp.concatenate([whh[0], whh[1], whh[2]], axis=1)         # (32, 96)
    bih_all = jnp.concatenate([bih[0], bih[1], bih[2]], axis=1)         # (1, 96)
    bhh_all = jnp.concatenate([bhh[0], bhh[1], bhh[2]], axis=1)         # (1, 96)
    # o_proj bias only ever feeds the GRU input projection -> fold it into b_ih.
    bih_eff = bih_all + jnp.dot(ob, wih_all)
    bg = jnp.concatenate([bih_eff, bhh_all], axis=0)                    # (2, 96)
    # NOTE: bq/bk/bv are zero by module construction (qkv_proj.bias.fill_(0)) -> dropped.
    return (w_qkv_p, ow_p, wih_all, whh_all, bg, lw, lb)


def multihead_biru_forward(x_emb, params):
    """x_emb: (B, S, E_IN) float32 BERT embeddings. Returns (B, OUTPUT_SIZE) log-probs."""
    bsz, seq, e_in = x_emb.shape
    assert (bsz, seq, e_in) == (B, S, E_IN)
    packed = pack_params(params)
    # time-major flatten so each GRU step reads a contiguous (B, ...) row block.
    x2d = jnp.transpose(x_emb, (1, 0, 2)).reshape(seq * bsz, e_in)

    vmem = pltpu.MemorySpace.VMEM
    out = pl.pallas_call(
        _mhba_kernel,
        out_shape=jax.ShapeDtypeStruct((bsz, OUTPUT_SIZE), jnp.float32),
        in_specs=[pl.BlockSpec(memory_space=vmem) for _ in range(1 + len(packed))],
        out_specs=pl.BlockSpec(memory_space=vmem),
    )(x2d, *packed)
    return out


def init_params(key):
    ks = jax.random.split(key, 8)

    def xavier(k, shape):
        bound = math.sqrt(6.0 / (shape[0] + shape[1]))
        return jax.random.uniform(k, shape, jnp.float32, -bound, bound)

    # qkv_proj: Linear(E_IN, 3*EMBED_DIM); store W^T and split per head / q,k,v.
    w_qkv = xavier(ks[0], (E_IN, 3 * EMBED_DIM)).reshape(E_IN, NUM_HEADS, 3 * HEAD_DIM)
    wq = jnp.transpose(w_qkv[:, :, 0 * HEAD_DIM:1 * HEAD_DIM], (1, 0, 2))  # (H, E_IN, hd)
    wk = jnp.transpose(w_qkv[:, :, 1 * HEAD_DIM:2 * HEAD_DIM], (1, 0, 2))
    wv = jnp.transpose(w_qkv[:, :, 2 * HEAD_DIM:3 * HEAD_DIM], (1, 0, 2))
    bq = jnp.zeros((NUM_HEADS, 1, HEAD_DIM), jnp.float32)   # qkv_proj.bias.fill_(0)
    bk = jnp.zeros_like(bq)
    bv = jnp.zeros_like(bq)

    # o_proj: Linear(EMBED_DIM, 64); W^T (100, 64) split into per-head row blocks.
    ow = xavier(ks[1], (EMBED_DIM, OPROJ_DIM)).reshape(NUM_HEADS, HEAD_DIM, OPROJ_DIM)
    ob = jnp.zeros((1, OPROJ_DIM), jnp.float32)             # o_proj.bias.fill_(0)

    # GRU reverse direction weights, stacked as (gate[r,z,n], in, out).
    gk = 1.0 / math.sqrt(GRU_HIDDEN)
    wih = jax.random.uniform(ks[2], (3, OPROJ_DIM, GRU_HIDDEN), jnp.float32, -gk, gk)
    whh = jax.random.uniform(ks[3], (3, GRU_HIDDEN, GRU_HIDDEN), jnp.float32, -gk, gk)
    bih = jax.random.uniform(ks[4], (3, 1, GRU_HIDDEN), jnp.float32, -gk, gk)
    bhh = jax.random.uniform(ks[5], (3, 1, GRU_HIDDEN), jnp.float32, -gk, gk)

    # label: Linear(32, OUTPUT_SIZE)
    lw = jax.random.uniform(ks[6], (GRU_HIDDEN, OUTPUT_SIZE), jnp.float32, -gk, gk)
    lb = jax.random.uniform(ks[7], (1, OUTPUT_SIZE), jnp.float32, -gk, gk)

    return (wq, wk, wv, bq, bk, bv, ow, ob, wih, whh, bih, bhh, lw, lb)


def reference_forward(x_emb, params):
    """Pure-JAX reference mirroring the PyTorch forward (for validation)."""
    wq, wk, wv, bq, bk, bv, ow, ob, wih, whh, bih, bhh, lw, lb = params
    scale = 1.0 / math.sqrt(HEAD_DIM)
    q = jnp.einsum('bse,hed->bhsd', x_emb, wq) + bq[None]
    k = jnp.einsum('bse,hed->bhsd', x_emb, wk) + bk[None]
    v = jnp.einsum('bse,hed->bhsd', x_emb, wv) + bv[None]
    logits = jnp.einsum('bhqd,bhkd->bhqk', q, k) * scale
    attn = jax.nn.softmax(logits, axis=-1)
    vals = jnp.einsum('bhqk,bhkd->bhqd', attn, v)
    attn_out = jnp.einsum('bhsd,hdo->bso', vals, ow) + ob[None]   # (B,S,64)

    h = jnp.zeros((x_emb.shape[0], GRU_HIDDEN), jnp.float32)
    for t in range(x_emb.shape[1] - 1, -1, -1):                    # reverse direction
        xt = attn_out[:, t, :]
        r = jax.nn.sigmoid(xt @ wih[0] + bih[0] + h @ whh[0] + bhh[0])
        z = jax.nn.sigmoid(xt @ wih[1] + bih[1] + h @ whh[1] + bhh[1])
        n = jnp.tanh(xt @ wih[2] + bih[2] + r * (h @ whh[2] + bhh[2]))
        h = (1.0 - z) * n + z * h
    out = h @ lw + lb
    return jax.nn.log_softmax(out, axis=-1)


if __name__ == "__main__":
    key = jax.random.PRNGKey(0)
    kp, kx = jax.random.split(key)
    params = init_params(kp)

    # Precomputed (frozen) BERT output embeddings -> kernel input.
    x_emb = jax.random.normal(kx, (B, S, E_IN), dtype=jnp.float32)

    out = multihead_biru_forward(x_emb, params)
    out = jax.block_until_ready(out)

    ref = reference_forward(x_emb, params)
    assert out.shape == (B, OUTPUT_SIZE)
    assert jnp.allclose(out, ref, rtol=1e-2, atol=1e-2), (out, ref)

    print("KERNEL_OK")
</pallas_src>

<mosaic_0001>
module attributes {stable_mosaic.version = 11 : i64} {
  func.func @_mhba_kernel(%arg0: memref<16x32xf32, #tpu.memory_space<vmem>>, %arg1: memref<32x384xf32, #tpu.memory_space<vmem>>, %arg2: memref<128x64xf32, #tpu.memory_space<vmem>>, %arg3: memref<64x96xf32, #tpu.memory_space<vmem>>, %arg4: memref<32x96xf32, #tpu.memory_space<vmem>>, %arg5: memref<2x96xf32, #tpu.memory_space<vmem>>, %arg6: memref<32x5xf32, #tpu.memory_space<vmem>>, %arg7: memref<1x5xf32, #tpu.memory_space<vmem>>, %arg8: memref<2x5xf32, #tpu.memory_space<vmem>>) attributes {dimension_semantics = [], scalar_prefetch = 0 : i64, scratch_operands = 0 : i64, tpu.core_type = #tpu.core_type<tc>} {
    %c0 = arith.constant 0 : index
    %c0_0 = arith.constant 0 : index
    %0 = vector.load %arg0[%c0, %c0_0] : memref<16x32xf32, #tpu.memory_space<vmem>>, vector<16x32xf32>
    %c0_1 = arith.constant 0 : index
    %c0_2 = arith.constant 0 : index
    %1 = vector.load %arg1[%c0_1, %c0_2] : memref<32x384xf32, #tpu.memory_space<vmem>>, vector<32x384xf32>
    %cst = arith.constant dense<0.000000e+00> : vector<16x384xf32>
    %2 = tpu.matmul %0, %1, %cst {dimension_numbers = #tpu.dot_dimension_numbers<[1], [0], [0], [1], [0, 0, 1, 1], [], []>} : vector<16x32xf32>, vector<32x384xf32>, vector<16x384xf32> -> vector<16x384xf32>
    %3 = tpu.iota {dimensions = array<i32: 0>} : vector<16x16xi32>
    %c2_i32 = arith.constant 2 : i32
    %c0_i32 = arith.constant 0 : i32
    %4 = arith.cmpi eq, %c2_i32, %c0_i32 : i32
    %c1_i32 = arith.constant 1 : i32
    %5 = arith.select %4, %c1_i32, %c2_i32 : i32
    %6 = vector.broadcast %5 : i32 to vector<16x16xi32>
    %7 = arith.remsi %3, %6 : vector<16x16xi32>
    %c0_i32_3 = arith.constant 0 : i32
    %8 = vector.broadcast %c0_i32_3 : i32 to vector<16x16xi32>
    %9 = arith.cmpi ne, %7, %8 : vector<16x16xi32>
    %c0_i32_4 = arith.constant 0 : i32
    %10 = vector.broadcast %c0_i32_4 : i32 to vector<16x16xi32>
    %11 = arith.cmpi slt, %7, %10 : vector<16x16xi32>
    %c0_i32_5 = arith.constant 0 : i32
    %12 = arith.cmpi slt, %5, %c0_i32_5 : i32
    %13 = vector.broadcast %12 : i1 to vector<16x16xi1>
    %14 = vector.broadcast %13 : vector<16x16xi1> to vector<16x16xi1>
    %15 = arith.xori %11, %14 : vector<16x16xi1>
    %16 = arith.andi %15, %9 : vector<16x16xi1>
    %17 = vector.broadcast %5 : i32 to vector<16x16xi32>
    %18 = arith.addi %7, %17 : vector<16x16xi32>
    %19 = arith.select %16, %18, %7 : vector<16x16xi1>, vector<16x16xi32>
    %20 = tpu.iota {dimensions = array<i32: 1>} : vector<16x16xi32>
    %c2_i32_6 = arith.constant 2 : i32
    %c0_i32_7 = arith.constant 0 : i32
    %21 = arith.cmpi eq, %c2_i32_6, %c0_i32_7 : i32
    %c1_i32_8 = arith.constant 1 : i32
    %22 = arith.select %21, %c1_i32_8, %c2_i32_6 : i32
    %23 = vector.broadcast %22 : i32 to vector<16x16xi32>
    %24 = arith.remsi %20, %23 : vector<16x16xi32>
    %c0_i32_9 = arith.constant 0 : i32
    %25 = vector.broadcast %c0_i32_9 : i32 to vector<16x16xi32>
    %26 = arith.cmpi ne, %24, %25 : vector<16x16xi32>
    %c0_i32_10 = arith.constant 0 : i32
    %27 = vector.broadcast %c0_i32_10 : i32 to vector<16x16xi32>
    %28 = arith.cmpi slt, %24, %27 : vector<16x16xi32>
    %c0_i32_11 = arith.constant 0 : i32
    %29 = arith.cmpi slt, %22, %c0_i32_11 : i32
    %30 = vector.broadcast %29 : i1 to vector<16x16xi1>
    %31 = vector.broadcast %30 : vector<16x16xi1> to vector<16x16xi1>
    %32 = arith.xori %28, %31 : vector<16x16xi1>
    %33 = arith.andi %32, %26 : vector<16x16xi1>
    %34 = vector.broadcast %22 : i32 to vector<16x16xi32>
    %35 = arith.addi %24, %34 : vector<16x16xi32>
    %36 = arith.select %33, %35, %24 : vector<16x16xi1>, vector<16x16xi32>
    %37 = arith.cmpi eq, %19, %36 : vector<16x16xi32>
    %38 = vector.extract_strided_slice %2 {offsets = [0, 0], sizes = [16, 32], strides = [1, 1]} : vector<16x384xf32> to vector<16x32xf32>
    %39 = vector.extract_strided_slice %2 {offsets = [0, 128], sizes = [16, 32], strides = [1, 1]} : vector<16x384xf32> to vector<16x32xf32>
    %40 = vector.extract_strided_slice %2 {offsets = [0, 256], sizes = [16, 32], strides = [1, 1]} : vector<16x384xf32> to vector<16x32xf32>
    %41 = tpu.transpose %39, [1, 0] : vector<16x32xf32> -> vector<32x16xf32>
    %cst_12 = arith.constant dense<0.000000e+00> : vector<16x16xf32>
    %42 = tpu.matmul %38, %41, %cst_12 {dimension_numbers = #tpu.dot_dimension_numbers<[1], [0], [0], [1], [0, 0, 1, 1], [], []>} : vector<16x32xf32>, vector<32x16xf32>, vector<16x16xf32> -> vector<16x16xf32>
    %cst_13 = arith.constant 2.000000e-01 : f32
    %43 = vector.broadcast %cst_13 : f32 to vector<16x16xf32>
    %44 = arith.mulf %42, %43 : vector<16x16xf32>
    %cst_14 = arith.constant -1.000000e+30 : f32
    %45 = vector.broadcast %cst_14 : f32 to vector<16x16xf32>
    %46 = arith.select %37, %44, %45 : vector<16x16xi1>, vector<16x16xf32>
    %cst_15 = arith.constant dense<0xFF800000> : vector<16xf32>
    %47 = vector.multi_reduction <maximumf>, %46, %cst_15 [1] : vector<16x16xf32> to vector<16xf32>
    %48 = vector.shape_cast %47 : vector<16xf32> to vector<16x1xf32>
    %49 = vector.broadcast %48 : vector<16x1xf32> to vector<16x16xf32>
    %50 = arith.subf %46, %49 : vector<16x16xf32>
    %51 = math.exp %50 : vector<16x16xf32>
    %cst_16 = arith.constant dense<0.000000e+00> : vector<16xf32>
    %52 = vector.multi_reduction <add>, %51, %cst_16 [1] : vector<16x16xf32> to vector<16xf32>
    %53 = vector.shape_cast %52 : vector<16xf32> to vector<16x1xf32>
    %54 = tpu.reciprocal %53 {approx = true} : vector<16x1xf32> -> vector<16x1xf32>
    %55 = vector.broadcast %54 : vector<16x1xf32> to vector<16x16xf32>
    %56 = arith.mulf %51, %55 : vector<16x16xf32>
    %cst_17 = arith.constant dense<0.000000e+00> : vector<16x32xf32>
    %57 = tpu.matmul %56, %40, %cst_17 {dimension_numbers = #tpu.dot_dimension_numbers<[1], [0], [0], [1], [0, 0, 1, 1], [], []>} : vector<16x16xf32>, vector<16x32xf32>, vector<16x32xf32> -> vector<16x32xf32>
    %58 = vector.extract_strided_slice %2 {offsets = [0, 32], sizes = [16, 32], strides = [1, 1]} : vector<16x384xf32> to vector<16x32xf32>
    %59 = vector.extract_strided_slice %2 {offsets = [0, 160], sizes = [16, 32], strides = [1, 1]} : vector<16x384xf32> to vector<16x32xf32>
    %60 = vector.extract_strided_slice %2 {offsets = [0, 288], sizes = [16, 32], strides = [1, 1]} : vector<16x384xf32> to vector<16x32xf32>
    %61 = tpu.transpose %59, [1, 0] : vector<16x32xf32> -> vector<32x16xf32>
    %cst_18 = arith.constant dense<0.000000e+00> : vector<16x16xf32>
    %62 = tpu.matmul %58, %61, %cst_18 {dimension_numbers = #tpu.dot_dimension_numbers<[1], [0], [0], [1], [0, 0, 1, 1], [], []>} : vector<16x32xf32>, vector<32x16xf32>, vector<16x16xf32> -> vector<16x16xf32>
    %cst_19 = arith.constant 2.000000e-01 : f32
    %63 = vector.broadcast %cst_19 : f32 to vector<16x16xf32>
    %64 = arith.mulf %62, %63 : vector<16x16xf32>
    %cst_20 = arith.constant -1.000000e+30 : f32
    %65 = vector.broadcast %cst_20 : f32 to vector<16x16xf32>
    %66 = arith.select %37, %64, %65 : vector<16x16xi1>, vector<16x16xf32>
    %cst_21 = arith.constant dense<0xFF800000> : vector<16xf32>
    %67 = vector.multi_reduction <maximumf>, %66, %cst_21 [1] : vector<16x16xf32> to vector<16xf32>
    %68 = vector.shape_cast %67 : vector<16xf32> to vector<16x1xf32>
    %69 = vector.broadcast %68 : vector<16x1xf32> to vector<16x16xf32>
    %70 = arith.subf %66, %69 : vector<16x16xf32>
    %71 = math.exp %70 : vector<16x16xf32>
    %cst_22 = arith.constant dense<0.000000e+00> : vector<16xf32>
    %72 = vector.multi_reduction <add>, %71, %cst_22 [1] : vector<16x16xf32> to vector<16xf32>
    %73 = vector.shape_cast %72 : vector<16xf32> to vector<16x1xf32>
    %74 = tpu.reciprocal %73 {approx = true} : vector<16x1xf32> -> vector<16x1xf32>
    %75 = vector.broadcast %74 : vector<16x1xf32> to vector<16x16xf32>
    %76 = arith.mulf %71, %75 : vector<16x16xf32>
    %cst_23 = arith.constant dense<0.000000e+00> : vector<16x32xf32>
    %77 = tpu.matmul %76, %60, %cst_23 {dimension_numbers = #tpu.dot_dimension_numbers<[1], [0], [0], [1], [0, 0, 1, 1], [], []>} : vector<16x16xf32>, vector<16x32xf32>, vector<16x32xf32> -> vector<16x32xf32>
    %78 = vector.extract_strided_slice %2 {offsets = [0, 64], sizes = [16, 32], strides = [1, 1]} : vector<16x384xf32> to vector<16x32xf32>
    %79 = vector.extract_strided_slice %2 {offsets = [0, 192], sizes = [16, 32], strides = [1, 1]} : vector<16x384xf32> to vector<16x32xf32>
    %80 = vector.extract_strided_slice %2 {offsets = [0, 320], sizes = [16, 32], strides = [1, 1]} : vector<16x384xf32> to vector<16x32xf32>
    %81 = tpu.transpose %79, [1, 0] : vector<16x32xf32> -> vector<32x16xf32>
    %cst_24 = arith.constant dense<0.000000e+00> : vector<16x16xf32>
    %82 = tpu.matmul %78, %81, %cst_24 {dimension_numbers = #tpu.dot_dimension_numbers<[1], [0], [0], [1], [0, 0, 1, 1], [], []>} : vector<16x32xf32>, vector<32x16xf32>, vector<16x16xf32> -> vector<16x16xf32>
    %cst_25 = arith.constant 2.000000e-01 : f32
    %83 = vector.broadcast %cst_25 : f32 to vector<16x16xf32>
    %84 = arith.mulf %82, %83 : vector<16x16xf32>
    %cst_26 = arith.constant -1.000000e+30 : f32
    %85 = vector.broadcast %cst_26 : f32 to vector<16x16xf32>
    %86 = arith.select %37, %84, %85 : vector<16x16xi1>, vector<16x16xf32>
    %cst_27 = arith.constant dense<0xFF800000> : vector<16xf32>
    %87 = vector.multi_reduction <maximumf>, %86, %cst_27 [1] : vector<16x16xf32> to vector<16xf32>
    %88 = vector.shape_cast %87 : vector<16xf32> to vector<16x1xf32>
    %89 = vector.broadcast %88 : vector<16x1xf32> to vector<16x16xf32>
    %90 = arith.subf %86, %89 : vector<16x16xf32>
    %91 = math.exp %90 : vector<16x16xf32>
    %cst_28 = arith.constant dense<0.000000e+00> : vector<16xf32>
    %92 = vector.multi_reduction <add>, %91, %cst_28 [1] : vector<16x16xf32> to vector<16xf32>
    %93 = vector.shape_cast %92 : vector<16xf32> to vector<16x1xf32>
    %94 = tpu.reciprocal %93 {approx = true} : vector<16x1xf32> -> vector<16x1xf32>
    %95 = vector.broadcast %94 : vector<16x1xf32> to vector<16x16xf32>
    %96 = arith.mulf %91, %95 : vector<16x16xf32>
    %cst_29 = arith.constant dense<0.000000e+00> : vector<16x32xf32>
    %97 = tpu.matmul %96, %80, %cst_29 {dimension_numbers = #tpu.dot_dimension_numbers<[1], [0], [0], [1], [0, 0, 1, 1], [], []>} : vector<16x16xf32>, vector<16x32xf32>, vector<16x32xf32> -> vector<16x32xf32>
    %98 = vector.extract_strided_slice %2 {offsets = [0, 96], sizes = [16, 32], strides = [1, 1]} : vector<16x384xf32> to vector<16x32xf32>
    %99 = vector.extract_strided_slice %2 {offsets = [0, 224], sizes = [16, 32], strides = [1, 1]} : vector<16x384xf32> to vector<16x32xf32>
    %100 = vector.extract_strided_slice %2 {offsets = [0, 352], sizes = [16, 32], strides = [1, 1]} : vector<16x384xf32> to vector<16x32xf32>
    %101 = tpu.transpose %99, [1, 0] : vector<16x32xf32> -> vector<32x16xf32>
    %cst_30 = arith.constant dense<0.000000e+00> : vector<16x16xf32>
    %102 = tpu.matmul %98, %101, %cst_30 {dimension_numbers = #tpu.dot_dimension_numbers<[1], [0], [0], [1], [0, 0, 1, 1], [], []>} : vector<16x32xf32>, vector<32x16xf32>, vector<16x16xf32> -> vector<16x16xf32>
    %cst_31 = arith.constant 2.000000e-01 : f32
    %103 = vector.broadcast %cst_31 : f32 to vector<16x16xf32>
    %104 = arith.mulf %102, %103 : vector<16x16xf32>
    %cst_32 = arith.constant -1.000000e+30 : f32
    %105 = vector.broadcast %cst_32 : f32 to vector<16x16xf32>
    %106 = arith.select %37, %104, %105 : vector<16x16xi1>, vector<16x16xf32>
    %cst_33 = arith.constant dense<0xFF800000> : vector<16xf32>
    %107 = vector.multi_reduction <maximumf>, %106, %cst_33 [1] : vector<16x16xf32> to vector<16xf32>
    %108 = vector.shape_cast %107 : vector<16xf32> to vector<16x1xf32>
    %109 = vector.broadcast %108 : vector<16x1xf32> to vector<16x16xf32>
    %110 = arith.subf %106, %109 : vector<16x16xf32>
    %111 = math.exp %110 : vector<16x16xf32>
    %cst_34 = arith.constant dense<0.000000e+00> : vector<16xf32>
    %112 = vector.multi_reduction <add>, %111, %cst_34 [1] : vector<16x16xf32> to vector<16xf32>
    %113 = vector.shape_cast %112 : vector<16xf32> to vector<16x1xf32>
    %114 = tpu.reciprocal %113 {approx = true} : vector<16x1xf32> -> vector<16x1xf32>
    %115 = vector.broadcast %114 : vector<16x1xf32> to vector<16x16xf32>
    %116 = arith.mulf %111, %115 : vector<16x16xf32>
    %cst_35 = arith.constant dense<0.000000e+00> : vector<16x32xf32>
    %117 = tpu.matmul %116, %100, %cst_35 {dimension_numbers = #tpu.dot_dimension_numbers<[1], [0], [0], [1], [0, 0, 1, 1], [], []>} : vector<16x16xf32>, vector<16x32xf32>, vector<16x32xf32> -> vector<16x32xf32>
    %118 = tpu.concatenate %57, %77, %97, %117 in 1 : vector<16x32xf32>, vector<16x32xf32>, vector<16x32xf32>, vector<16x32xf32> -> vector<16x128xf32>
    %c0_36 = arith.constant 0 : index
    %c0_37 = arith.constant 0 : index
    %119 = vector.load %arg2[%c0_36, %c0_37] : memref<128x64xf32, #tpu.memory_space<vmem>>, vector<128x64xf32>
    %cst_38 = arith.constant dense<0.000000e+00> : vector<16x64xf32>
    %120 = tpu.matmul %118, %119, %cst_38 {dimension_numbers = #tpu.dot_dimension_numbers<[1], [0], [0], [1], [0, 0, 1, 1], [], []>} : vector<16x128xf32>, vector<128x64xf32>, vector<16x64xf32> -> vector<16x64xf32>
    %c0_39 = arith.constant 0 : index
    %c0_40 = arith.constant 0 : index
    %121 = vector.load %arg3[%c0_39, %c0_40] : memref<64x96xf32, #tpu.memory_space<vmem>>, vector<64x96xf32>
    %cst_41 = arith.constant dense<0.000000e+00> : vector<16x96xf32>
    %122 = tpu.matmul %120, %121, %cst_41 {dimension_numbers = #tpu.dot_dimension_numbers<[1], [0], [0], [1], [0, 0, 1, 1], [], []>} : vector<16x64xf32>, vector<64x96xf32>, vector<16x96xf32> -> vector<16x96xf32>
    %c0_42 = arith.constant 0 : index
    %c0_43 = arith.constant 0 : index
    %123 = vector.load %arg5[%c0_42, %c0_43] : memref<2x96xf32, #tpu.memory_space<vmem>>, vector<1x96xf32>
    %124 = vector.broadcast %123 : vector<1x96xf32> to vector<16x96xf32>
    %125 = arith.addf %122, %124 : vector<16x96xf32>
    %c0_44 = arith.constant 0 : index
    %c0_45 = arith.constant 0 : index
    %126 = vector.load %arg4[%c0_44, %c0_45] : memref<32x96xf32, #tpu.memory_space<vmem>>, vector<32x96xf32>
    %c1 = arith.constant 1 : index
    %c0_46 = arith.constant 0 : index
    %127 = vector.load %arg5[%c1, %c0_46] : memref<2x96xf32, #tpu.memory_space<vmem>>, vector<1x96xf32>
    %cst_47 = arith.constant 0.000000e+00 : f32
    %128 = vector.broadcast %cst_47 : f32 to vector<2x32xf32>
    %129 = vector.extract_strided_slice %125 {offsets = [14, 0], sizes = [2, 96], strides = [1, 1]} : vector<16x96xf32> to vector<2x96xf32>
    %cst_48 = arith.constant dense<0.000000e+00> : vector<2x96xf32>
    %130 = tpu.matmul %128, %126, %cst_48 {dimension_numbers = #tpu.dot_dimension_numbers<[1], [0], [0], [1], [0, 0, 1, 1], [], []>} : vector<2x32xf32>, vector<32x96xf32>, vector<2x96xf32> -> vector<2x96xf32>
    %131 = vector.broadcast %127 : vector<1x96xf32> to vector<2x96xf32>
    %132 = arith.addf %130, %131 : vector<2x96xf32>
    %133 = vector.extract_strided_slice %129 {offsets = [0, 0], sizes = [2, 32], strides = [1, 1]} : vector<2x96xf32> to vector<2x32xf32>
    %134 = vector.extract_strided_slice %132 {offsets = [0, 0], sizes = [2, 32], strides = [1, 1]} : vector<2x96xf32> to vector<2x32xf32>
    %135 = arith.addf %133, %134 : vector<2x32xf32>
    %136 = arith.negf %135 : vector<2x32xf32>
    %137 = math.exp %136 : vector<2x32xf32>
    %cst_49 = arith.constant 1.000000e+00 : f32
    %138 = vector.broadcast %cst_49 : f32 to vector<2x32xf32>
    %139 = arith.addf %138, %137 : vector<2x32xf32>
    %140 = arith.divf %138, %139 : vector<2x32xf32>
    %141 = vector.extract_strided_slice %129 {offsets = [0, 32], sizes = [2, 32], strides = [1, 1]} : vector<2x96xf32> to vector<2x32xf32>
    %142 = vector.extract_strided_slice %132 {offsets = [0, 32], sizes = [2, 32], strides = [1, 1]} : vector<2x96xf32> to vector<2x32xf32>
    %143 = arith.addf %141, %142 : vector<2x32xf32>
    %144 = arith.negf %143 : vector<2x32xf32>
    %145 = math.exp %144 : vector<2x32xf32>
    %cst_50 = arith.constant 1.000000e+00 : f32
    %146 = vector.broadcast %cst_50 : f32 to vector<2x32xf32>
    %147 = arith.addf %146, %145 : vector<2x32xf32>
    %148 = arith.divf %146, %147 : vector<2x32xf32>
    %149 = vector.extract_strided_slice %129 {offsets = [0, 64], sizes = [2, 32], strides = [1, 1]} : vector<2x96xf32> to vector<2x32xf32>
    %150 = vector.extract_strided_slice %132 {offsets = [0, 64], sizes = [2, 32], strides = [1, 1]} : vector<2x96xf32> to vector<2x32xf32>
    %151 = arith.mulf %140, %150 : vector<2x32xf32>
    %152 = arith.addf %149, %151 : vector<2x32xf32>
    %153 = math.tanh %152 : vector<2x32xf32>
    %cst_51 = arith.constant 1.000000e+00 : f32
    %154 = vector.broadcast %cst_51 : f32 to vector<2x32xf32>
    %155 = arith.subf %154, %148 : vector<2x32xf32>
    %156 = arith.mulf %155, %153 : vector<2x32xf32>
    %157 = arith.mulf %148, %128 : vector<2x32xf32>
    %158 = arith.addf %156, %157 : vector<2x32xf32>
    %159 = vector.extract_strided_slice %125 {offsets = [12, 0], sizes = [2, 96], strides = [1, 1]} : vector<16x96xf32> to vector<2x96xf32>
    %cst_52 = arith.constant dense<0.000000e+00> : vector<2x96xf32>
    %160 = tpu.matmul %158, %126, %cst_52 {dimension_numbers = #tpu.dot_dimension_numbers<[1], [0], [0], [1], [0, 0, 1, 1], [], []>} : vector<2x32xf32>, vector<32x96xf32>, vector<2x96xf32> -> vector<2x96xf32>
    %161 = vector.broadcast %127 : vector<1x96xf32> to vector<2x96xf32>
    %162 = arith.addf %160, %161 : vector<2x96xf32>
    %163 = vector.extract_strided_slice %159 {offsets = [0, 0], sizes = [2, 32], strides = [1, 1]} : vector<2x96xf32> to vector<2x32xf32>
    %164 = vector.extract_strided_slice %162 {offsets = [0, 0], sizes = [2, 32], strides = [1, 1]} : vector<2x96xf32> to vector<2x32xf32>
    %165 = arith.addf %163, %164 : vector<2x32xf32>
    %166 = arith.negf %165 : vector<2x32xf32>
    %167 = math.exp %166 : vector<2x32xf32>
    %cst_53 = arith.constant 1.000000e+00 : f32
    %168 = vector.broadcast %cst_53 : f32 to vector<2x32xf32>
    %169 = arith.addf %168, %167 : vector<2x32xf32>
    %170 = arith.divf %168, %169 : vector<2x32xf32>
    %171 = vector.extract_strided_slice %159 {offsets = [0, 32], sizes = [2, 32], strides = [1, 1]} : vector<2x96xf32> to vector<2x32xf32>
    %172 = vector.extract_strided_slice %162 {offsets = [0, 32], sizes = [2, 32], strides = [1, 1]} : vector<2x96xf32> to vector<2x32xf32>
    %173 = arith.addf %171, %172 : vector<2x32xf32>
    %174 = arith.negf %173 : vector<2x32xf32>
    %175 = math.exp %174 : vector<2x32xf32>
    %cst_54 = arith.constant 1.000000e+00 : f32
    %176 = vector.broadcast %cst_54 : f32 to vector<2x32xf32>
    %177 = arith.addf %176, %175 : vector<2x32xf32>
    %178 = arith.divf %176, %177 : vector<2x32xf32>
    %179 = vector.extract_strided_slice %159 {offsets = [0, 64], sizes = [2, 32], strides = [1, 1]} : vector<2x96xf32> to vector<2x32xf32>
    %180 = vector.extract_strided_slice %162 {offsets = [0, 64], sizes = [2, 32], strides = [1, 1]} : vector<2x96xf32> to vector<2x32xf32>
    %181 = arith.mulf %170, %180 : vector<2x32xf32>
    %182 = arith.addf %179, %181 : vector<2x32xf32>
    %183 = math.tanh %182 : vector<2x32xf32>
    %cst_55 = arith.constant 1.000000e+00 : f32
    %184 = vector.broadcast %cst_55 : f32 to vector<2x32xf32>
    %185 = arith.subf %184, %178 : vector<2x32xf32>
    %186 = arith.mulf %185, %183 : vector<2x32xf32>
    %187 = arith.mulf %178, %158 : vector<2x32xf32>
    %188 = arith.addf %186, %187 : vector<2x32xf32>
    %189 = vector.extract_strided_slice %125 {offsets = [10, 0], sizes = [2, 96], strides = [1, 1]} : vector<16x96xf32> to vector<2x96xf32>
    %cst_56 = arith.constant dense<0.000000e+00> : vector<2x96xf32>
    %190 = tpu.matmul %188, %126, %cst_56 {dimension_numbers = #tpu.dot_dimension_numbers<[1], [0], [0], [1], [0, 0, 1, 1], [], []>} : vector<2x32xf32>, vector<32x96xf32>, vector<2x96xf32> -> vector<2x96xf32>
    %191 = vector.broadcast %127 : vector<1x96xf32> to vector<2x96xf32>
    %192 = arith.addf %190, %191 : vector<2x96xf32>
    %193 = vector.extract_strided_slice %189 {offsets = [0, 0], sizes = [2, 32], strides = [1, 1]} : vector<2x96xf32> to vector<2x32xf32>
    %194 = vector.extract_strided_slice %192 {offsets = [0, 0], sizes = [2, 32], strides = [1, 1]} : vector<2x96xf32> to vector<2x32xf32>
    %195 = arith.addf %193, %194 : vector<2x32xf32>
    %196 = arith.negf %195 : vector<2x32xf32>
    %197 = math.exp %196 : vector<2x32xf32>
    %cst_57 = arith.constant 1.000000e+00 : f32
    %198 = vector.broadcast %cst_57 : f32 to vector<2x32xf32>
    %199 = arith.addf %198, %197 : vector<2x32xf32>
    %200 = arith.divf %198, %199 : vector<2x32xf32>
    %201 = vector.extract_strided_slice %189 {offsets = [0, 32], sizes = [2, 32], strides = [1, 1]} : vector<2x96xf32> to vector<2x32xf32>
    %202 = vector.extract_strided_slice %192 {offsets = [0, 32], sizes = [2, 32], strides = [1, 1]} : vector<2x96xf32> to vector<2x32xf32>
    %203 = arith.addf %201, %202 : vector<2x32xf32>
    %204 = arith.negf %203 : vector<2x32xf32>
    %205 = math.exp %204 : vector<2x32xf32>
    %cst_58 = arith.constant 1.000000e+00 : f32
    %206 = vector.broadcast %cst_58 : f32 to vector<2x32xf32>
    %207 = arith.addf %206, %205 : vector<2x32xf32>
    %208 = arith.divf %206, %207 : vector<2x32xf32>
    %209 = vector.extract_strided_slice %189 {offsets = [0, 64], sizes = [2, 32], strides = [1, 1]} : vector<2x96xf32> to vector<2x32xf32>
    %210 = vector.extract_strided_slice %192 {offsets = [0, 64], sizes = [2, 32], strides = [1, 1]} : vector<2x96xf32> to vector<2x32xf32>
    %211 = arith.mulf %200, %210 : vector<2x32xf32>
    %212 = arith.addf %209, %211 : vector<2x32xf32>
    %213 = math.tanh %212 : vector<2x32xf32>
    %cst_59 = arith.constant 1.000000e+00 : f32
    %214 = vector.broadcast %cst_59 : f32 to vector<2x32xf32>
    %215 = arith.subf %214, %208 : vector<2x32xf32>
    %216 = arith.mulf %215, %213 : vector<2x32xf32>
    %217 = arith.mulf %208, %188 : vector<2x32xf32>
    %218 = arith.addf %216, %217 : vector<2x32xf32>
    %219 = vector.extract_strided_slice %125 {offsets = [8, 0], sizes = [2, 96], strides = [1, 1]} : vector<16x96xf32> to vector<2x96xf32>
    %cst_60 = arith.constant dense<0.000000e+00> : vector<2x96xf32>
    %220 = tpu.matmul %218, %126, %cst_60 {dimension_numbers = #tpu.dot_dimension_numbers<[1], [0], [0], [1], [0, 0, 1, 1], [], []>} : vector<2x32xf32>, vector<32x96xf32>, vector<2x96xf32> -> vector<2x96xf32>
    %221 = vector.broadcast %127 : vector<1x96xf32> to vector<2x96xf32>
    %222 = arith.addf %220, %221 : vector<2x96xf32>
    %223 = vector.extract_strided_slice %219 {offsets = [0, 0], sizes = [2, 32], strides = [1, 1]} : vector<2x96xf32> to vector<2x32xf32>
    %224 = vector.extract_strided_slice %222 {offsets = [0, 0], sizes = [2, 32], strides = [1, 1]} : vector<2x96xf32> to vector<2x32xf32>
    %225 = arith.addf %223, %224 : vector<2x32xf32>
    %226 = arith.negf %225 : vector<2x32xf32>
    %227 = math.exp %226 : vector<2x32xf32>
    %cst_61 = arith.constant 1.000000e+00 : f32
    %228 = vector.broadcast %cst_61 : f32 to vector<2x32xf32>
    %229 = arith.addf %228, %227 : vector<2x32xf32>
    %230 = arith.divf %228, %229 : vector<2x32xf32>
    %231 = vector.extract_strided_slice %219 {offsets = [0, 32], sizes = [2, 32], strides = [1, 1]} : vector<2x96xf32> to vector<2x32xf32>
    %232 = vector.extract_strided_slice %222 {offsets = [0, 32], sizes = [2, 32], strides = [1, 1]} : vector<2x96xf32> to vector<2x32xf32>
    %233 = arith.addf %231, %232 : vector<2x32xf32>
    %234 = arith.negf %233 : vector<2x32xf32>
    %235 = math.exp %234 : vector<2x32xf32>
    %cst_62 = arith.constant 1.000000e+00 : f32
    %236 = vector.broadcast %cst_62 : f32 to vector<2x32xf32>
    %237 = arith.addf %236, %235 : vector<2x32xf32>
    %238 = arith.divf %236, %237 : vector<2x32xf32>
    %239 = vector.extract_strided_slice %219 {offsets = [0, 64], sizes = [2, 32], strides = [1, 1]} : vector<2x96xf32> to vector<2x32xf32>
    %240 = vector.extract_strided_slice %222 {offsets = [0, 64], sizes = [2, 32], strides = [1, 1]} : vector<2x96xf32> to vector<2x32xf32>
    %241 = arith.mulf %230, %240 : vector<2x32xf32>
    %242 = arith.addf %239, %241 : vector<2x32xf32>
    %243 = math.tanh %242 : vector<2x32xf32>
    %cst_63 = arith.constant 1.000000e+00 : f32
    %244 = vector.broadcast %cst_63 : f32 to vector<2x32xf32>
    %245 = arith.subf %244, %238 : vector<2x32xf32>
    %246 = arith.mulf %245, %243 : vector<2x32xf32>
    %247 = arith.mulf %238, %218 : vector<2x32xf32>
    %248 = arith.addf %246, %247 : vector<2x32xf32>
    %249 = vector.extract_strided_slice %125 {offsets = [6, 0], sizes = [2, 96], strides = [1, 1]} : vector<16x96xf32> to vector<2x96xf32>
    %cst_64 = arith.constant dense<0.000000e+00> : vector<2x96xf32>
    %250 = tpu.matmul %248, %126, %cst_64 {dimension_numbers = #tpu.dot_dimension_numbers<[1], [0], [0], [1], [0, 0, 1, 1], [], []>} : vector<2x32xf32>, vector<32x96xf32>, vector<2x96xf32> -> vector<2x96xf32>
    %251 = vector.broadcast %127 : vector<1x96xf32> to vector<2x96xf32>
    %252 = arith.addf %250, %251 : vector<2x96xf32>
    %253 = vector.extract_strided_slice %249 {offsets = [0, 0], sizes = [2, 32], strides = [1, 1]} : vector<2x96xf32> to vector<2x32xf32>
    %254 = vector.extract_strided_slice %252 {offsets = [0, 0], sizes = [2, 32], strides = [1, 1]} : vector<2x96xf32> to vector<2x32xf32>
    %255 = arith.addf %253, %254 : vector<2x32xf32>
    %256 = arith.negf %255 : vector<2x32xf32>
    %257 = math.exp %256 : vector<2x32xf32>
    %cst_65 = arith.constant 1.000000e+00 : f32
    %258 = vector.broadcast %cst_65 : f32 to vector<2x32xf32>
    %259 = arith.addf %258, %257 : vector<2x32xf32>
    %260 = arith.divf %258, %259 : vector<2x32xf32>
    %261 = vector.extract_strided_slice %249 {offsets = [0, 32], sizes = [2, 32], strides = [1, 1]} : vector<2x96xf32> to vector<2x32xf32>
    %262 = vector.extract_strided_slice %252 {offsets = [0, 32], sizes = [2, 32], strides = [1, 1]} : vector<2x96xf32> to vector<2x32xf32>
    %263 = arith.addf %261, %262 : vector<2x32xf32>
    %264 = arith.negf %263 : vector<2x32xf32>
    %265 = math.exp %264 : vector<2x32xf32>
    %cst_66 = arith.constant 1.000000e+00 : f32
    %266 = vector.broadcast %cst_66 : f32 to vector<2x32xf32>
    %267 = arith.addf %266, %265 : vector<2x32xf32>
    %268 = arith.divf %266, %267 : vector<2x32xf32>
    %269 = vector.extract_strided_slice %249 {offsets = [0, 64], sizes = [2, 32], strides = [1, 1]} : vector<2x96xf32> to vector<2x32xf32>
    %270 = vector.extract_strided_slice %252 {offsets = [0, 64], sizes = [2, 32], strides = [1, 1]} : vector<2x96xf32> to vector<2x32xf32>
    %271 = arith.mulf %260, %270 : vector<2x32xf32>
    %272 = arith.addf %269, %271 : vector<2x32xf32>
    %273 = math.tanh %272 : vector<2x32xf32>
    %cst_67 = arith.constant 1.000000e+00 : f32
    %274 = vector.broadcast %cst_67 : f32 to vector<2x32xf32>
    %275 = arith.subf %274, %268 : vector<2x32xf32>
    %276 = arith.mulf %275, %273 : vector<2x32xf32>
    %277 = arith.mulf %268, %248 : vector<2x32xf32>
    %278 = arith.addf %276, %277 : vector<2x32xf32>
    %279 = vector.extract_strided_slice %125 {offsets = [4, 0], sizes = [2, 96], strides = [1, 1]} : vector<16x96xf32> to vector<2x96xf32>
    %cst_68 = arith.constant dense<0.000000e+00> : vector<2x96xf32>
    %280 = tpu.matmul %278, %126, %cst_68 {dimension_numbers = #tpu.dot_dimension_numbers<[1], [0], [0], [1], [0, 0, 1, 1], [], []>} : vector<2x32xf32>, vector<32x96xf32>, vector<2x96xf32> -> vector<2x96xf32>
    %281 = vector.broadcast %127 : vector<1x96xf32> to vector<2x96xf32>
    %282 = arith.addf %280, %281 : vector<2x96xf32>
    %283 = vector.extract_strided_slice %279 {offsets = [0, 0], sizes = [2, 32], strides = [1, 1]} : vector<2x96xf32> to vector<2x32xf32>
    %284 = vector.extract_strided_slice %282 {offsets = [0, 0], sizes = [2, 32], strides = [1, 1]} : vector<2x96xf32> to vector<2x32xf32>
    %285 = arith.addf %283, %284 : vector<2x32xf32>
    %286 = arith.negf %285 : vector<2x32xf32>
    %287 = math.exp %286 : vector<2x32xf32>
    %cst_69 = arith.constant 1.000000e+00 : f32
    %288 = vector.broadcast %cst_69 : f32 to vector<2x32xf32>
    %289 = arith.addf %288, %287 : vector<2x32xf32>
    %290 = arith.divf %288, %289 : vector<2x32xf32>
    %291 = vector.extract_strided_slice %279 {offsets = [0, 32], sizes = [2, 32], strides = [1, 1]} : vector<2x96xf32> to vector<2x32xf32>
    %292 = vector.extract_strided_slice %282 {offsets = [0, 32], sizes = [2, 32], strides = [1, 1]} : vector<2x96xf32> to vector<2x32xf32>
    %293 = arith.addf %291, %292 : vector<2x32xf32>
    %294 = arith.negf %293 : vector<2x32xf32>
    %295 = math.exp %294 : vector<2x32xf32>
    %cst_70 = arith.constant 1.000000e+00 : f32
    %296 = vector.broadcast %cst_70 : f32 to vector<2x32xf32>
    %297 = arith.addf %296, %295 : vector<2x32xf32>
    %298 = arith.divf %296, %297 : vector<2x32xf32>
    %299 = vector.extract_strided_slice %279 {offsets = [0, 64], sizes = [2, 32], strides = [1, 1]} : vector<2x96xf32> to vector<2x32xf32>
    %300 = vector.extract_strided_slice %282 {offsets = [0, 64], sizes = [2, 32], strides = [1, 1]} : vector<2x96xf32> to vector<2x32xf32>
    %301 = arith.mulf %290, %300 : vector<2x32xf32>
    %302 = arith.addf %299, %301 : vector<2x32xf32>
    %303 = math.tanh %302 : vector<2x32xf32>
    %cst_71 = arith.constant 1.000000e+00 : f32
    %304 = vector.broadcast %cst_71 : f32 to vector<2x32xf32>
    %305 = arith.subf %304, %298 : vector<2x32xf32>
    %306 = arith.mulf %305, %303 : vector<2x32xf32>
    %307 = arith.mulf %298, %278 : vector<2x32xf32>
    %308 = arith.addf %306, %307 : vector<2x32xf32>
    %309 = vector.extract_strided_slice %125 {offsets = [2, 0], sizes = [2, 96], strides = [1, 1]} : vector<16x96xf32> to vector<2x96xf32>
    %cst_72 = arith.constant dense<0.000000e+00> : vector<2x96xf32>
    %310 = tpu.matmul %308, %126, %cst_72 {dimension_numbers = #tpu.dot_dimension_numbers<[1], [0], [0], [1], [0, 0, 1, 1], [], []>} : vector<2x32xf32>, vector<32x96xf32>, vector<2x96xf32> -> vector<2x96xf32>
    %311 = vector.broadcast %127 : vector<1x96xf32> to vector<2x96xf32>
    %312 = arith.addf %310, %311 : vector<2x96xf32>
    %313 = vector.extract_strided_slice %309 {offsets = [0, 0], sizes = [2, 32], strides = [1, 1]} : vector<2x96xf32> to vector<2x32xf32>
    %314 = vector.extract_strided_slice %312 {offsets = [0, 0], sizes = [2, 32], strides = [1, 1]} : vector<2x96xf32> to vector<2x32xf32>
    %315 = arith.addf %313, %314 : vector<2x32xf32>
    %316 = arith.negf %315 : vector<2x32xf32>
    %317 = math.exp %316 : vector<2x32xf32>
    %cst_73 = arith.constant 1.000000e+00 : f32
    %318 = vector.broadcast %cst_73 : f32 to vector<2x32xf32>
    %319 = arith.addf %318, %317 : vector<2x32xf32>
    %320 = arith.divf %318, %319 : vector<2x32xf32>
    %321 = vector.extract_strided_slice %309 {offsets = [0, 32], sizes = [2, 32], strides = [1, 1]} : vector<2x96xf32> to vector<2x32xf32>
    %322 = vector.extract_strided_slice %312 {offsets = [0, 32], sizes = [2, 32], strides = [1, 1]} : vector<2x96xf32> to vector<2x32xf32>
    %323 = arith.addf %321, %322 : vector<2x32xf32>
    %324 = arith.negf %323 : vector<2x32xf32>
    %325 = math.exp %324 : vector<2x32xf32>
    %cst_74 = arith.constant 1.000000e+00 : f32
    %326 = vector.broadcast %cst_74 : f32 to vector<2x32xf32>
    %327 = arith.addf %326, %325 : vector<2x32xf32>
    %328 = arith.divf %326, %327 : vector<2x32xf32>
    %329 = vector.extract_strided_slice %309 {offsets = [0, 64], sizes = [2, 32], strides = [1, 1]} : vector<2x96xf32> to vector<2x32xf32>
    %330 = vector.extract_strided_slice %312 {offsets = [0, 64], sizes = [2, 32], strides = [1, 1]} : vector<2x96xf32> to vector<2x32xf32>
    %331 = arith.mulf %320, %330 : vector<2x32xf32>
    %332 = arith.addf %329, %331 : vector<2x32xf32>
    %333 = math.tanh %332 : vector<2x32xf32>
    %cst_75 = arith.constant 1.000000e+00 : f32
    %334 = vector.broadcast %cst_75 : f32 to vector<2x32xf32>
    %335 = arith.subf %334, %328 : vector<2x32xf32>
    %336 = arith.mulf %335, %333 : vector<2x32xf32>
    %337 = arith.mulf %328, %308 : vector<2x32xf32>
    %338 = arith.addf %336, %337 : vector<2x32xf32>
    %339 = vector.extract_strided_slice %125 {offsets = [0, 0], sizes = [2, 96], strides = [1, 1]} : vector<16x96xf32> to vector<2x96xf32>
    %cst_76 = arith.constant dense<0.000000e+00> : vector<2x96xf32>
    %340 = tpu.matmul %338, %126, %cst_76 {dimension_numbers = #tpu.dot_dimension_numbers<[1], [0], [0], [1], [0, 0, 1, 1], [], []>} : vector<2x32xf32>, vector<32x96xf32>, vector<2x96xf32> -> vector<2x96xf32>
    %341 = vector.broadcast %127 : vector<1x96xf32> to vector<2x96xf32>
    %342 = arith.addf %340, %341 : vector<2x96xf32>
    %343 = vector.extract_strided_slice %339 {offsets = [0, 0], sizes = [2, 32], strides = [1, 1]} : vector<2x96xf32> to vector<2x32xf32>
    %344 = vector.extract_strided_slice %342 {offsets = [0, 0], sizes = [2, 32], strides = [1, 1]} : vector<2x96xf32> to vector<2x32xf32>
    %345 = arith.addf %343, %344 : vector<2x32xf32>
    %346 = arith.negf %345 : vector<2x32xf32>
    %347 = math.exp %346 : vector<2x32xf32>
    %cst_77 = arith.constant 1.000000e+00 : f32
    %348 = vector.broadcast %cst_77 : f32 to vector<2x32xf32>
    %349 = arith.addf %348, %347 : vector<2x32xf32>
    %350 = arith.divf %348, %349 : vector<2x32xf32>
    %351 = vector.extract_strided_slice %339 {offsets = [0, 32], sizes = [2, 32], strides = [1, 1]} : vector<2x96xf32> to vector<2x32xf32>
    %352 = vector.extract_strided_slice %342 {offsets = [0, 32], sizes = [2, 32], strides = [1, 1]} : vector<2x96xf32> to vector<2x32xf32>
    %353 = arith.addf %351, %352 : vector<2x32xf32>
    %354 = arith.negf %353 : vector<2x32xf32>
    %355 = math.exp %354 : vector<2x32xf32>
    %cst_78 = arith.constant 1.000000e+00 : f32
    %356 = vector.broadcast %cst_78 : f32 to vector<2x32xf32>
    %357 = arith.addf %356, %355 : vector<2x32xf32>
    %358 = arith.divf %356, %357 : vector<2x32xf32>
    %359 = vector.extract_strided_slice %339 {offsets = [0, 64], sizes = [2, 32], strides = [1, 1]} : vector<2x96xf32> to vector<2x32xf32>
    %360 = vector.extract_strided_slice %342 {offsets = [0, 64], sizes = [2, 32], strides = [1, 1]} : vector<2x96xf32> to vector<2x32xf32>
    %361 = arith.mulf %350, %360 : vector<2x32xf32>
    %362 = arith.addf %359, %361 : vector<2x32xf32>
    %363 = math.tanh %362 : vector<2x32xf32>
    %cst_79 = arith.constant 1.000000e+00 : f32
    %364 = vector.broadcast %cst_79 : f32 to vector<2x32xf32>
    %365 = arith.subf %364, %358 : vector<2x32xf32>
    %366 = arith.mulf %365, %363 : vector<2x32xf32>
    %367 = arith.mulf %358, %338 : vector<2x32xf32>
    %368 = arith.addf %366, %367 : vector<2x32xf32>
    %c0_80 = arith.constant 0 : index
    %c0_81 = arith.constant 0 : index
    %369 = vector.load %arg6[%c0_80, %c0_81] : memref<32x5xf32, #tpu.memory_space<vmem>>, vector<32x5xf32>
    %cst_82 = arith.constant dense<0.000000e+00> : vector<2x5xf32>
    %370 = tpu.matmul %368, %369, %cst_82 {dimension_numbers = #tpu.dot_dimension_numbers<[1], [0], [0], [1], [0, 0, 1, 1], [], []>} : vector<2x32xf32>, vector<32x5xf32>, vector<2x5xf32> -> vector<2x5xf32>
    %c0_83 = arith.constant 0 : index
    %c0_84 = arith.constant 0 : index
    %371 = vector.load %arg7[%c0_83, %c0_84] : memref<1x5xf32, #tpu.memory_space<vmem>>, vector<1x5xf32>
    %372 = vector.broadcast %371 : vector<1x5xf32> to vector<2x5xf32>
    %373 = arith.addf %370, %372 : vector<2x5xf32>
    %cst_85 = arith.constant dense<0xFF800000> : vector<2xf32>
    %374 = vector.multi_reduction <maximumf>, %373, %cst_85 [1] : vector<2x5xf32> to vector<2xf32>
    %375 = vector.shape_cast %374 : vector<2xf32> to vector<2x1xf32>
    %376 = vector.broadcast %375 : vector<2x1xf32> to vector<2x5xf32>
    %377 = arith.subf %373, %376 : vector<2x5xf32>
    %378 = math.exp %377 : vector<2x5xf32>
    %cst_86 = arith.constant dense<0.000000e+00> : vector<2xf32>
    %379 = vector.multi_reduction <add>, %378, %cst_86 [1] : vector<2x5xf32> to vector<2xf32>
    %380 = vector.shape_cast %379 : vector<2xf32> to vector<2x1xf32>
    %381 = math.log %380 : vector<2x1xf32>
    %382 = arith.addf %375, %381 : vector<2x1xf32>
    %383 = vector.broadcast %382 : vector<2x1xf32> to vector<2x5xf32>
    %384 = arith.subf %373, %383 : vector<2x5xf32>
    %c0_87 = arith.constant 0 : index
    %c0_88 = arith.constant 0 : index
    %385 = vector.load %arg8[%c0_87, %c0_88] : memref<2x5xf32, #tpu.memory_space<vmem>>, vector<2x5xf32>
    tpu.vector_store %arg8[%c0_87, %c0_88], %384 {strides = array<i32>} : memref<2x5xf32, #tpu.memory_space<vmem>>, vector<2x5xf32>,
    return
  }
}

</mosaic_0001>

<llo_original>
// kernel: tpu_custom_call.1
$region0: #{tpu_custom_call.1}
  #allocation0 [shape = 'u32[]', space=smem, size = 0x4, offset = 0x4, fixed_abs, tag = 'smem constant byte address 0x4 - core index']
  #allocation1 [shape = 'u32[72,128]{1,0:T(1,128)}', space=vmem, size = 0x9000, scoped, tag = 'internal scratch']
  %s0 = inlined_call_operand.vmem [shape: f32[16,32], index: 0, kind: input, shape index: {}]
  %s1 = inlined_call_operand.vmem [shape: f32[32,384], index: 1, kind: input, shape index: {}]
  %s2 = inlined_call_operand.vmem [shape: f32[128,64], index: 2, kind: input, shape index: {}]
  %s3 = inlined_call_operand.vmem [shape: f32[64,96], index: 3, kind: input, shape index: {}]
  %s4 = inlined_call_operand.vmem [shape: f32[32,96], index: 4, kind: input, shape index: {}]
  %s5 = inlined_call_operand.vmem [shape: f32[2,96], index: 5, kind: input, shape index: {}]
  %s6 = inlined_call_operand.vmem [shape: f32[32,5], index: 6, kind: input, shape index: {}]
  %s7 = inlined_call_operand.vmem [shape: f32[1,5], index: 7, kind: input, shape index: {}]
  %s8 = inlined_call_operand.hbm [shape: f32[2,5], index: 8, kind: output, shape index: {}]
  %s9 = sld [smem:[#allocation0]]
  $region42: #{tpu_custom_call.1} parent=0
    _
  %s11 = ssub.s32 1, %s9
  %s12 = scalar_select 0, %s11, %s9
  $region1: #{tpu_custom_call.1} parent=0
    #allocation2 [shape = 'u8[1024]{0}', space=vmem, size = 0x400, scoped, tag = 'output window, operand 0, single buffered']
    #allocation3 [shape = 's32[1]{0}', space=sflag, size = 0x4, scoped, tag = 'scoped memory for tpu_custom_call.1']
    %13 = vsyncpa [#allocation3], 0
    // Predicated region
    $region2: #{tpu_custom_call.1} parent=1 // pred_check
      _
    $region3: #{tpu_custom_call.1} parent=1 // pred_check_branch
      %15 = sbr.rel (0) target = $region5
    $region4: #{tpu_custom_call.1} parent=1 // pred_region
      _
    $region5: #{tpu_custom_call.1} parent=1 // pred_fallthru
      _
    // Predicated region
    $region6: #{tpu_custom_call.1} parent=1 // pred_check
      _
    $region7: #{tpu_custom_call.1} parent=1 // pred_check_branch
      %17 = sbr.rel (0) target = $region9
    $region8: #{tpu_custom_call.1} parent=1 // pred_region
      _
    $region9: #{tpu_custom_call.1} parent=1 // pred_fallthru
      _
    // Predicated region
    $region10: #{tpu_custom_call.1} parent=1 // pred_check
      _
    $region11: #{tpu_custom_call.1} parent=1 // pred_check_branch
      %19 = sbr.rel (0) target = $region13
    $region12: #{tpu_custom_call.1} parent=1 // pred_region
      _
    $region13: #{tpu_custom_call.1} parent=1 // pred_fallthru
      _
    // Predicated region
    $region14: #{tpu_custom_call.1} parent=1 // pred_check
      _
    $region15: #{tpu_custom_call.1} parent=1 // pred_check_branch
      %21 = sbr.rel (0) target = $region17
    $region16: #{tpu_custom_call.1} parent=1 // pred_region
      _
    $region17: #{tpu_custom_call.1} parent=1 // pred_fallthru
      _
    // Predicated region
    $region18: #{tpu_custom_call.1} parent=1 // pred_check
      _
    $region19: #{tpu_custom_call.1} parent=1 // pred_check_branch
      %23 = sbr.rel (0) target = $region21
    $region20: #{tpu_custom_call.1} parent=1 // pred_region
      _
    $region21: #{tpu_custom_call.1} parent=1 // pred_fallthru
      _
    // Predicated region
    $region22: #{tpu_custom_call.1} parent=1 // pred_check
      _
    $region23: #{tpu_custom_call.1} parent=1 // pred_check_branch
      %25 = sbr.rel (0) target = $region25
    $region24: #{tpu_custom_call.1} parent=1 // pred_region
      _
    $region25: #{tpu_custom_call.1} parent=1 // pred_fallthru
      _
    // Predicated region
    $region26: #{tpu_custom_call.1} parent=1 // pred_check
      _
    $region27: #{tpu_custom_call.1} parent=1 // pred_check_branch
      %27 = sbr.rel (0) target = $region29
    $region28: #{tpu_custom_call.1} parent=1 // pred_region
      _
    $region29: #{tpu_custom_call.1} parent=1 // pred_fallthru
      _
    // Predicated region
    $region30: #{tpu_custom_call.1} parent=1 // pred_check
      _
    $region31: #{tpu_custom_call.1} parent=1 // pred_check_branch
      %29 = sbr.rel (0) target = $region33
    $region32: #{tpu_custom_call.1} parent=1 // pred_region
      _
    $region33: #{tpu_custom_call.1} parent=1 // pred_fallthru
      _
    %v30 = vld [vmem:[%s0] sm:$0xff]
    %v31 = vld [vmem:[%s0 + $0x8] sm:$0xff]
    %v32 = vld [vmem:[%s1] sm:$0xff]
    %v33 = vld [vmem:[%s1 + $0x8] sm:$0xff]
    %v34 = vld [vmem:[%s1 + $0x10] sm:$0xff]
    %v35 = vld [vmem:[%s1 + $0x18] sm:$0xff]
    %v36 = vld [vmem:[%s1 + $0x20] sm:$0xff]
    %v37 = vld [vmem:[%s1 + $0x28] sm:$0xff]
    %v38 = vld [vmem:[%s1 + $0x30] sm:$0xff]
    %v39 = vld [vmem:[%s1 + $0x38] sm:$0xff]
    %v40 = vld [vmem:[%s1 + $0x40] sm:$0xff]
    %v41 = vld [vmem:[%s1 + $0x48] sm:$0xff]
    %v42 = vld [vmem:[%s1 + $0x50] sm:$0xff]
    %v43 = vld [vmem:[%s1 + $0x58] sm:$0xff]
    %vm44 = vcmask 261120
    %v46 = vsel %vm44, %v30, 0
    %v49 = vsel %vm44, %v31, 0
    %51 = vmatpush.msra.mxu0 0.0
    %52 = vmatpush.msra.mxu0 0.0
    %53 = vmatpush.msra.mxu0 0.0
    %54 = vmatpush.msra.mxu0 0.0
    %55 = vmatpush.msra.mxu0 0.0
    %56 = vmatpush.msra.mxu0 0.0
    %57 = vmatpush.msra.mxu0 0.0
    %58 = vmatpush.msra.mxu0 0.0
    %59 = vmatpush.msra.mxu0 0.0
    %60 = vmatpush.msra.mxu0 0.0
    %61 = vmatpush.msra.mxu0 0.0
    %62 = vmatpush.msra.mxu0 0.0
    %63 = vmatpush.msra.mxu0 %v41
    %64 = vmatpush.msra.mxu0 %v38
    %65 = vmatpush.msra.mxu0 %v35
    %66 = vmatpush.msra.mxu0 %v32
    %67 = vmatmul.f32.gmra.mxu0 %v46
    %v68 = vpop.f32.mrf.mxu0
    %v69 = vadd.f32 0.0, %v68
    %70 = vmatmul.f32.gmra.mxu0 %v49
    %v71 = vpop.f32.mrf.mxu0
    %v72 = vadd.f32 0.0, %v71
    %73 = vdwg.mxu0
    %74 = vmatpush.msra.mxu0 0.0
    %75 = vmatpush.msra.mxu0 0.0
    %76 = vmatpush.msra.mxu0 0.0
    %77 = vmatpush.msra.mxu0 0.0
    %78 = vmatpush.msra.mxu0 0.0
    %79 = vmatpush.msra.mxu0 0.0
    %80 = vmatpush.msra.mxu0 0.0
    %81 = vmatpush.msra.mxu0 0.0
    %82 = vmatpush.msra.mxu0 0.0
    %83 = vmatpush.msra.mxu0 0.0
    %84 = vmatpush.msra.mxu0 0.0
    %85 = vmatpush.msra.mxu0 0.0
    %86 = vmatpush.msra.mxu0 %v42
    %87 = vmatpush.msra.mxu0 %v39
    %88 = vmatpush.msra.mxu0 %v36
    %89 = vmatpush.msra.mxu0 %v33
    %90 = vmatmul.f32.gmra.mxu0 %v46
    %v91 = vpop.f32.mrf.mxu0
    %v92 = vadd.f32 0.0, %v91
    %93 = vmatmul.f32.gmra.mxu0 %v49
    %v94 = vpop.f32.mrf.mxu0
    %v95 = vadd.f32 0.0, %v94
    %96 = vdwg.mxu0
    %97 = vmatpush.msra.mxu0 0.0
    %98 = vmatpush.msra.mxu0 0.0
    %99 = vmatpush.msra.mxu0 0.0
    %100 = vmatpush.msra.mxu0 0.0
    %101 = vmatpush.msra.mxu0 0.0
    %102 = vmatpush.msra.mxu0 0.0
    %103 = vmatpush.msra.mxu0 0.0
    %104 = vmatpush.msra.mxu0 0.0
    %105 = vmatpush.msra.mxu0 0.0
    %106 = vmatpush.msra.mxu0 0.0
    %107 = vmatpush.msra.mxu0 0.0
    %108 = vmatpush.msra.mxu0 0.0
    %109 = vmatpush.msra.mxu0 %v43
    %110 = vmatpush.msra.mxu0 %v40
    %111 = vmatpush.msra.mxu0 %v37
    %112 = vmatpush.msra.mxu0 %v34
    %113 = vmatmul.f32.gmra.mxu0 %v46
    %v114 = vpop.f32.mrf.mxu0
    %v115 = vadd.f32 0.0, %v114
    %116 = vmatmul.f32.gmra.mxu0 %v49
    %v117 = vpop.f32.mrf.mxu0
    %v118 = vadd.f32 0.0, %v117
    %119 = vdwg.mxu0
    %v120 = vlaneseq
    %v121 = vshrl.u32 %v120, 7
    %v122 = vadd.s32 %v121, 8
    %vm123 = vcmp.lt.s32.totalorder %v121, 0
    %v124 = vsub.s32 0, %v121
    %v125 = vsel %vm123, %v124, %v121
    %v126 = vshrl.u32 %v125, 1
    %v127 = vand.u32 %v125, 1
    %v128 = vsub.s32 0, %v127
    %v129 = vsel %vm123, %v128, %v127
    %vm130 = vcmp.lt.s32.totalorder %v122, 0
    %v131 = vsub.s32 0, %v122
    %v132 = vsel %vm130, %v131, %v122
    %v133 = vshrl.u32 %v132, 1
    %v134 = vand.u32 %v132, 1
    %v135 = vsub.s32 0, %v134
    %v136 = vsel %vm130, %v135, %v134
    %vm137 = vcmp.ne.s32.totalorder %v129, 0
    %vm138 = vcmp.ne.s32.totalorder %v136, 0
    %vm139 = vcmp.lt.s32.totalorder %v129, 0
    %vm140 = vcmp.lt.s32.totalorder %v136, 0
    %vm141 = vmand %vm139, %vm137
    %vm142 = vmand %vm140, %vm138
    %v143 = vadd.s32 %v129, 2
    %v144 = vadd.s32 %v136, 2
    %v145 = vsel %vm141, %v143, %v129
    %v146 = vsel %vm142, %v144, %v136
    %v147 = vlaneseq
    %v148 = vand.u32 %v147, 127
    %vm149 = vcmp.lt.s32.totalorder %v148, 0
    %v150 = vsub.s32 0, %v148
    %v151 = vsel %vm149, %v150, %v148
    %v152 = vshrl.u32 %v151, 1
    %v153 = vand.u32 %v151, 1
    %v154 = vsub.s32 0, %v153
    %v155 = vsel %vm149, %v154, %v153
    %vm156 = vcmp.ne.s32.totalorder %v155, 0
    %vm157 = vcmp.lt.s32.totalorder %v155, 0
    %vm158 = vmand %vm157, %vm156
    %v159 = vadd.s32 %v155, 2
    %v160 = vsel %vm158, %v159, %v155
    %vm161 = vcmp.eq.s32.totalorder %v145, %v160
    %vm162 = vcmp.eq.s32.totalorder %v146, %v160
    %v164 = vsel %vm44, %v69, 0
    %v167 = vsel %vm44, %v72, 0
    %v170 = vsel %vm44, %v92, 0
    %v173 = vsel %vm44, %v95, 0
    %175 = vmatpush.xpose.msra.mxu0 0.0
    %176 = vmatpush.xpose.msra.mxu0 0.0
    %177 = vmatpush.xpose.msra.mxu0 0.0
    %178 = vmatpush.xpose.msra.mxu0 0.0
    %179 = vmatpush.xpose.msra.mxu0 0.0
    %180 = vmatpush.xpose.msra.mxu0 0.0
    %181 = vmatpush.xpose.msra.mxu0 0.0
    %182 = vmatpush.xpose.msra.mxu0 0.0
    %183 = vmatpush.xpose.msra.mxu0 0.0
    %184 = vmatpush.xpose.msra.mxu0 0.0
    %185 = vmatpush.xpose.msra.mxu0 0.0
    %186 = vmatpush.xpose.msra.mxu0 0.0
    %187 = vmatpush.xpose.msra.mxu0 0.0
    %188 = vmatpush.xpose.msra.mxu0 0.0
    %189 = vmatpush.xpose.msra.mxu0 %v173
    %190 = vmatpush.xpose.msra.mxu0 %v170
    %191 = vmatmul.f32.gmra.mxu0 %v164
    %v192 = vpop.f32.mrf.mxu0
    %v193 = vadd.f32 0.0, %v192
    %194 = vmatmul.f32.gmra.mxu0 %v167
    %v195 = vpop.f32.mrf.mxu0
    %v196 = vadd.f32 0.0, %v195
    %197 = vdwg.mxu0
    %v198 = vmul.f32 %v193, 0.2
    %v199 = vmul.f32 %v196, 0.2
    %v200 = vsel %vm161, %v198, -1e+30
    %v201 = vsel %vm162, %v199, -1e+30
    %vm202 = vcmask 130048
    %v203 = vsel %vm202, %v200, -inf
    %204 = vmax.xlane.f32.xlu0 %v203
    %v205 = vpop.xlane.xlu0 %204
    %v206 = vsel %vm202, %v201, -inf
    %207 = vmax.xlane.f32.xlu0 %v206
    %v208 = vpop.xlane.xlu0 %207
    %v209 = vsub.f32 %v200, %v205
    %v210 = vsub.f32 %v201, %v208
    %v211 = vmul.f32 %v209, 1.442695
    %v212 = vpow.pop %v211
    %v213 = vmul.f32 %v210, 1.442695
    %v214 = vpow.pop %v213
    %v215 = vsel %vm202, %v212, 0.0
    %216 = vadd.xlane.f32.xlu0 %v215
    %v217 = vpop.xlane.xlu0 %216
    %v218 = vsel %vm202, %v214, 0.0
    %219 = vadd.xlane.f32.xlu0 %v218
    %v220 = vpop.xlane.xlu0 %219
    %v221 = vrcp.pop %v217
    %v222 = vrcp.pop %v220
    %v223 = vmul.f32 %v212, %v221
    %v224 = vmul.f32 %v214, %v222
    %v226 = vsel %vm202, %v223, 0
    %v229 = vsel %vm202, %v224, 0
    %231 = vmatpush.msra.mxu0 0.0
    %232 = vmatpush.msra.mxu0 0.0
    %233 = vmatpush.msra.mxu0 0.0
    %234 = vmatpush.msra.mxu0 0.0
    %235 = vmatpush.msra.mxu0 0.0
    %236 = vmatpush.msra.mxu0 0.0
    %237 = vmatpush.msra.mxu0 0.0
    %238 = vmatpush.msra.mxu0 0.0
    %239 = vmatpush.msra.mxu0 0.0
    %240 = vmatpush.msra.mxu0 0.0
    %241 = vmatpush.msra.mxu0 0.0
    %242 = vmatpush.msra.mxu0 0.0
    %243 = vmatpush.msra.mxu0 0.0
    %244 = vmatpush.msra.mxu0 0.0
    %245 = vmatpush.msra.mxu0 %v118
    %246 = vmatpush.msra.mxu0 %v115
    %247 = vmatmul.f32.gmra.mxu0 %v226
    %v248 = vpop.f32.mrf.mxu0
    %v249 = vadd.f32 0.0, %v248
    %250 = vmatmul.f32.gmra.mxu0 %v229
    %v251 = vpop.f32.mrf.mxu0
    %v252 = vadd.f32 0.0, %v251
    %253 = vdwg.mxu0
    %254 = vrot.lane.b32.xlu0 %v69, 96
    %v255 = vpop.permute.xlu0 %254
    %256 = vrot.lane.b32.xlu0 %v72, 96
    %v257 = vpop.permute.xlu0 %256
    %258 = vrot.lane.b32.xlu0 %v92, 96
    %v259 = vpop.permute.xlu0 %258
    %260 = vrot.lane.b32.xlu0 %v95, 96
    %v261 = vpop.permute.xlu0 %260
    %v262 = vsel %vm44, %v255, 0
    %v264 = vsel %vm44, %v257, 0
    %v266 = vsel %vm44, %v259, 0
    %v268 = vsel %vm44, %v261, 0
    %270 = vmatpush.xpose.msra.mxu0 0.0
    %271 = vmatpush.xpose.msra.mxu0 0.0
    %272 = vmatpush.xpose.msra.mxu0 0.0
    %273 = vmatpush.xpose.msra.mxu0 0.0
    %274 = vmatpush.xpose.msra.mxu0 0.0
    %275 = vmatpush.xpose.msra.mxu0 0.0
    %276 = vmatpush.xpose.msra.mxu0 0.0
    %277 = vmatpush.xpose.msra.mxu0 0.0
    %278 = vmatpush.xpose.msra.mxu0 0.0
    %279 = vmatpush.xpose.msra.mxu0 0.0
    %280 = vmatpush.xpose.msra.mxu0 0.0
    %281 = vmatpush.xpose.msra.mxu0 0.0
    %282 = vmatpush.xpose.msra.mxu0 0.0
    %283 = vmatpush.xpose.msra.mxu0 0.0
    %284 = vmatpush.xpose.msra.mxu0 %v268
    %285 = vmatpush.xpose.msra.mxu0 %v266
    %286 = vmatmul.f32.gmra.mxu0 %v262
    %v287 = vpop.f32.mrf.mxu0
    %v288 = vadd.f32 0.0, %v287
    %289 = vmatmul.f32.gmra.mxu0 %v264
    %v290 = vpop.f32.mrf.mxu0
    %v291 = vadd.f32 0.0, %v290
    %292 = vdwg.mxu0
    %v293 = vmul.f32 %v288, 0.2
    %v294 = vmul.f32 %v291, 0.2
    %v295 = vsel %vm161, %v293, -1e+30
    %v296 = vsel %vm162, %v294, -1e+30
    %v297 = vsel %vm202, %v295, -inf
    %298 = vmax.xlane.f32.xlu0 %v297
    %v299 = vpop.xlane.xlu0 %298
    %v300 = vsel %vm202, %v296, -inf
    %301 = vmax.xlane.f32.xlu0 %v300
    %v302 = vpop.xlane.xlu0 %301
    %v303 = vsub.f32 %v295, %v299
    %v304 = vsub.f32 %v296, %v302
    %v305 = vmul.f32 %v303, 1.442695
    %v306 = vpow.pop %v305
    %v307 = vmul.f32 %v304, 1.442695
    %v308 = vpow.pop %v307
    %v309 = vsel %vm202, %v306, 0.0
    %310 = vadd.xlane.f32.xlu0 %v309
    %v311 = vpop.xlane.xlu0 %310
    %v312 = vsel %vm202, %v308, 0.0
    %313 = vadd.xlane.f32.xlu0 %v312
    %v314 = vpop.xlane.xlu0 %313
    %v315 = vrcp.pop %v311
    %v316 = vrcp.pop %v314
    %v317 = vmul.f32 %v306, %v315
    %v318 = vmul.f32 %v308, %v316
    %321 = vrot.lane.b32.xlu0 %v115, 96
    %v322 = vpop.permute.xlu0 %321
    %323 = vrot.lane.b32.xlu0 %v118, 96
    %v324 = vpop.permute.xlu0 %323
    %v328 = vsel %vm202, %v317, 0
    %v331 = vsel %vm202, %v318, 0
    %333 = vmatpush.msra.mxu0 0.0
    %334 = vmatpush.msra.mxu0 0.0
    %335 = vmatpush.msra.mxu0 0.0
    %336 = vmatpush.msra.mxu0 0.0
    %337 = vmatpush.msra.mxu0 0.0
    %338 = vmatpush.msra.mxu0 0.0
    %339 = vmatpush.msra.mxu0 0.0
    %340 = vmatpush.msra.mxu0 0.0
    %341 = vmatpush.msra.mxu0 0.0
    %342 = vmatpush.msra.mxu0 0.0
    %343 = vmatpush.msra.mxu0 0.0
    %344 = vmatpush.msra.mxu0 0.0
    %345 = vmatpush.msra.mxu0 0.0
    %346 = vmatpush.msra.mxu0 0.0
    %347 = vmatpush.msra.mxu0 %v324
    %348 = vmatpush.msra.mxu0 %v322
    %349 = vmatmul.f32.gmra.mxu0 %v328
    %v350 = vpop.f32.mrf.mxu0
    %v351 = vadd.f32 0.0, %v350
    %352 = vmatmul.f32.gmra.mxu0 %v331
    %v353 = vpop.f32.mrf.mxu0
    %v354 = vadd.f32 0.0, %v353
    %355 = vdwg.mxu0
    %356 = vrot.lane.b32.xlu0 %v69, 64
    %v357 = vpop.permute.xlu0 %356
    %358 = vrot.lane.b32.xlu0 %v72, 64
    %v359 = vpop.permute.xlu0 %358
    %360 = vrot.lane.b32.xlu0 %v92, 64
    %v361 = vpop.permute.xlu0 %360
    %362 = vrot.lane.b32.xlu0 %v95, 64
    %v363 = vpop.permute.xlu0 %362
    %v364 = vsel %vm44, %v357, 0
    %v366 = vsel %vm44, %v359, 0
    %v368 = vsel %vm44, %v361, 0
    %v370 = vsel %vm44, %v363, 0
    %372 = vmatpush.xpose.msra.mxu0 0.0
    %373 = vmatpush.xpose.msra.mxu0 0.0
    %374 = vmatpush.xpose.msra.mxu0 0.0
    %375 = vmatpush.xpose.msra.mxu0 0.0
    %376 = vmatpush.xpose.msra.mxu0 0.0
    %377 = vmatpush.xpose.msra.mxu0 0.0
    %378 = vmatpush.xpose.msra.mxu0 0.0
    %379 = vmatpush.xpose.msra.mxu0 0.0
    %380 = vmatpush.xpose.msra.mxu0 0.0
    %381 = vmatpush.xpose.msra.mxu0 0.0
    %382 = vmatpush.xpose.msra.mxu0 0.0
    %383 = vmatpush.xpose.msra.mxu0 0.0
    %384 = vmatpush.xpose.msra.mxu0 0.0
    %385 = vmatpush.xpose.msra.mxu0 0.0
    %386 = vmatpush.xpose.msra.mxu0 %v370
    %387 = vmatpush.xpose.msra.mxu0 %v368
    %388 = vmatmul.f32.gmra.mxu0 %v364
    %v389 = vpop.f32.mrf.mxu0
    %v390 = vadd.f32 0.0, %v389
    %391 = vmatmul.f32.gmra.mxu0 %v366
    %v392 = vpop.f32.mrf.mxu0
    %v393 = vadd.f32 0.0, %v392
    %394 = vdwg.mxu0
    %v395 = vmul.f32 %v390, 0.2
    %v396 = vmul.f32 %v393, 0.2
    %v397 = vsel %vm161, %v395, -1e+30
    %v398 = vsel %vm162, %v396, -1e+30
    %v399 = vsel %vm202, %v397, -inf
    %400 = vmax.xlane.f32.xlu0 %v399
    %v401 = vpop.xlane.xlu0 %400
    %v402 = vsel %vm202, %v398, -inf
    %403 = vmax.xlane.f32.xlu0 %v402
    %v404 = vpop.xlane.xlu0 %403
    %v405 = vsub.f32 %v397, %v401
    %v406 = vsub.f32 %v398, %v404
    %v407 = vmul.f32 %v405, 1.442695
    %v408 = vpow.pop %v407
    %v409 = vmul.f32 %v406, 1.442695
    %v410 = vpow.pop %v409
    %v411 = vsel %vm202, %v408, 0.0
    %412 = vadd.xlane.f32.xlu0 %v411
    %v413 = vpop.xlane.xlu0 %412
    %v414 = vsel %vm202, %v410, 0.0
    %415 = vadd.xlane.f32.xlu0 %v414
    %v416 = vpop.xlane.xlu0 %415
    %v417 = vrcp.pop %v413
    %v418 = vrcp.pop %v416
    %v419 = vmul.f32 %v408, %v417
    %v420 = vmul.f32 %v410, %v418
    %421 = vrot.lane.b32.xlu0 %v115, 64
    %v422 = vpop.permute.xlu0 %421
    %423 = vrot.lane.b32.xlu0 %v118, 64
    %v424 = vpop.permute.xlu0 %423
    %v428 = vsel %vm202, %v419, 0
    %v431 = vsel %vm202, %v420, 0
    %433 = vmatpush.msra.mxu0 0.0
    %434 = vmatpush.msra.mxu0 0.0
    %435 = vmatpush.msra.mxu0 0.0
    %436 = vmatpush.msra.mxu0 0.0
    %437 = vmatpush.msra.mxu0 0.0
    %438 = vmatpush.msra.mxu0 0.0
    %439 = vmatpush.msra.mxu0 0.0
    %440 = vmatpush.msra.mxu0 0.0
    %441 = vmatpush.msra.mxu0 0.0
    %442 = vmatpush.msra.mxu0 0.0
    %443 = vmatpush.msra.mxu0 0.0
    %444 = vmatpush.msra.mxu0 0.0
    %445 = vmatpush.msra.mxu0 0.0
    %446 = vmatpush.msra.mxu0 0.0
    %447 = vmatpush.msra.mxu0 %v424
    %448 = vmatpush.msra.mxu0 %v422
    %449 = vmatmul.f32.gmra.mxu0 %v428
    %v450 = vpop.f32.mrf.mxu0
    %v451 = vadd.f32 0.0, %v450
    %452 = vmatmul.f32.gmra.mxu0 %v431
    %v453 = vpop.f32.mrf.mxu0
    %v454 = vadd.f32 0.0, %v453
    %455 = vdwg.mxu0
    %456 = vrot.lane.b32.xlu0 %v69, 32
    %v457 = vpop.permute.xlu0 %456
    %458 = vrot.lane.b32.xlu0 %v72, 32
    %v459 = vpop.permute.xlu0 %458
    %460 = vrot.lane.b32.xlu0 %v92, 32
    %v461 = vpop.permute.xlu0 %460
    %462 = vrot.lane.b32.xlu0 %v95, 32
    %v463 = vpop.permute.xlu0 %462
    %v464 = vsel %vm44, %v457, 0
    %v466 = vsel %vm44, %v459, 0
    %v468 = vsel %vm44, %v461, 0
    %v470 = vsel %vm44, %v463, 0
    %472 = vmatpush.xpose.msra.mxu0 0.0
    %473 = vmatpush.xpose.msra.mxu0 0.0
    %474 = vmatpush.xpose.msra.mxu0 0.0
    %475 = vmatpush.xpose.msra.mxu0 0.0
    %476 = vmatpush.xpose.msra.mxu0 0.0
    %477 = vmatpush.xpose.msra.mxu0 0.0
    %478 = vmatpush.xpose.msra.mxu0 0.0
    %479 = vmatpush.xpose.msra.mxu0 0.0
    %480 = vmatpush.xpose.msra.mxu0 0.0
    %481 = vmatpush.xpose.msra.mxu0 0.0
    %482 = vmatpush.xpose.msra.mxu0 0.0
    %483 = vmatpush.xpose.msra.mxu0 0.0
    %484 = vmatpush.xpose.msra.mxu0 0.0
    %485 = vmatpush.xpose.msra.mxu0 0.0
    %486 = vmatpush.xpose.msra.mxu0 %v470
    %487 = vmatpush.xpose.msra.mxu0 %v468
    %488 = vmatmul.f32.gmra.mxu0 %v464
    %v489 = vpop.f32.mrf.mxu0
    %v490 = vadd.f32 0.0, %v489
    %491 = vmatmul.f32.gmra.mxu0 %v466
    %v492 = vpop.f32.mrf.mxu0
    %v493 = vadd.f32 0.0, %v492
    %494 = vdwg.mxu0
    %v495 = vmul.f32 %v490, 0.2
    %v496 = vmul.f32 %v493, 0.2
    %v497 = vsel %vm161, %v495, -1e+30
    %v498 = vsel %vm162, %v496, -1e+30
    %v499 = vsel %vm202, %v497, -inf
    %500 = vmax.xlane.f32.xlu0 %v499
    %v501 = vpop.xlane.xlu0 %500
    %v502 = vsel %vm202, %v498, -inf
    %503 = vmax.xlane.f32.xlu0 %v502
    %v504 = vpop.xlane.xlu0 %503
    %v505 = vsub.f32 %v497, %v501
    %v506 = vsub.f32 %v498, %v504
    %v507 = vmul.f32 %v505, 1.442695
    %v508 = vpow.pop %v507
    %v509 = vmul.f32 %v506, 1.442695
    %v510 = vpow.pop %v509
    %v511 = vsel %vm202, %v508, 0.0
    %512 = vadd.xlane.f32.xlu0 %v511
    %v513 = vpop.xlane.xlu0 %512
    %v514 = vsel %vm202, %v510, 0.0
    %515 = vadd.xlane.f32.xlu0 %v514
    %v516 = vpop.xlane.xlu0 %515
    %v517 = vrcp.pop %v513
    %v518 = vrcp.pop %v516
    %v519 = vmul.f32 %v508, %v517
    %v520 = vmul.f32 %v510, %v518
    %521 = vrot.lane.b32.xlu0 %v115, 32
    %v522 = vpop.permute.xlu0 %521
    %523 = vrot.lane.b32.xlu0 %v118, 32
    %v524 = vpop.permute.xlu0 %523
    %v528 = vsel %vm202, %v519, 0
    %v531 = vsel %vm202, %v520, 0
    %533 = vmatpush.msra.mxu0 0.0
    %534 = vmatpush.msra.mxu0 0.0
    %535 = vmatpush.msra.mxu0 0.0
    %536 = vmatpush.msra.mxu0 0.0
    %537 = vmatpush.msra.mxu0 0.0
    %538 = vmatpush.msra.mxu0 0.0
    %539 = vmatpush.msra.mxu0 0.0
    %540 = vmatpush.msra.mxu0 0.0
    %541 = vmatpush.msra.mxu0 0.0
    %542 = vmatpush.msra.mxu0 0.0
    %543 = vmatpush.msra.mxu0 0.0
    %544 = vmatpush.msra.mxu0 0.0
    %545 = vmatpush.msra.mxu0 0.0
    %546 = vmatpush.msra.mxu0 0.0
    %547 = vmatpush.msra.mxu0 %v524
    %548 = vmatpush.msra.mxu0 %v522
    %549 = vmatmul.f32.gmra.mxu0 %v528
    %v550 = vpop.f32.mrf.mxu0
    %v551 = vadd.f32 0.0, %v550
    %552 = vmatmul.f32.gmra.mxu0 %v531
    %v553 = vpop.f32.mrf.mxu0
    %v554 = vadd.f32 0.0, %v553
    %555 = vdwg.mxu0
    %558 = vrot.lane.b32.xlu0 %v351, 32
    %v559 = vpop.permute.xlu0 %558
    %560 = vrot.lane.b32.xlu0 %v354, 32
    %v561 = vpop.permute.xlu0 %560
    %566 = vrot.lane.b32.xlu0 %v451, 64
    %v567 = vpop.permute.xlu0 %566
    %568 = vrot.lane.b32.xlu0 %v454, 64
    %v569 = vpop.permute.xlu0 %568
    %574 = vrot.lane.b32.xlu0 %v551, 96
    %v575 = vpop.permute.xlu0 %574
    %576 = vrot.lane.b32.xlu0 %v554, 96
    %v577 = vpop.permute.xlu0 %576
    %v580 = vsel %vm44, %v249, %v559
    %v581 = vsel %vm44, %v252, %v561
    %vm582 = vcmask 523264
    %v583 = vsel %vm582, %v580, %v567
    %v584 = vsel %vm582, %v581, %v569
    %vm585 = vcmask 785408
    %v586 = vsel %vm585, %v583, %v575
    %v587 = vsel %vm585, %v584, %v577
    %v588 = vld [vmem:[%s2] sm:$0xff]
    %v589 = vld [vmem:[%s2 + $0x8] sm:$0xff]
    %v590 = vld [vmem:[%s2 + $0x10] sm:$0xff]
    %v591 = vld [vmem:[%s2 + $0x18] sm:$0xff]
    %v592 = vld [vmem:[%s2 + $0x20] sm:$0xff]
    %v593 = vld [vmem:[%s2 + $0x28] sm:$0xff]
    %v594 = vld [vmem:[%s2 + $0x30] sm:$0xff]
    %v595 = vld [vmem:[%s2 + $0x38] sm:$0xff]
    %v596 = vld [vmem:[%s2 + $0x40] sm:$0xff]
    %v597 = vld [vmem:[%s2 + $0x48] sm:$0xff]
    %v598 = vld [vmem:[%s2 + $0x50] sm:$0xff]
    %v599 = vld [vmem:[%s2 + $0x58] sm:$0xff]
    %v600 = vld [vmem:[%s2 + $0x60] sm:$0xff]
    %v601 = vld [vmem:[%s2 + $0x68] sm:$0xff]
    %v602 = vld [vmem:[%s2 + $0x70] sm:$0xff]
    %v603 = vld [vmem:[%s2 + $0x78] sm:$0xff]
    %604 = vmatpush.msra.mxu0 %v603
    %605 = vmatpush.msra.mxu0 %v602
    %606 = vmatpush.msra.mxu0 %v601
    %607 = vmatpush.msra.mxu0 %v600
    %608 = vmatpush.msra.mxu0 %v599
    %609 = vmatpush.msra.mxu0 %v598
    %610 = vmatpush.msra.mxu0 %v597
    %611 = vmatpush.msra.mxu0 %v596
    %612 = vmatpush.msra.mxu0 %v595
    %613 = vmatpush.msra.mxu0 %v594
    %614 = vmatpush.msra.mxu0 %v593
    %615 = vmatpush.msra.mxu0 %v592
    %616 = vmatpush.msra.mxu0 %v591
    %617 = vmatpush.msra.mxu0 %v590
    %618 = vmatpush.msra.mxu0 %v589
    %619 = vmatpush.msra.mxu0 %v588
    %620 = vmatmul.f32.gmra.mxu0 %v586
    %v621 = vpop.f32.mrf.mxu0
    %v622 = vadd.f32 0.0, %v621
    %623 = vmatmul.f32.gmra.mxu0 %v587
    %v624 = vpop.f32.mrf.mxu0
    %v625 = vadd.f32 0.0, %v624
    %626 = vdwg.mxu0
    %v627 = vld [vmem:[%s3] sm:$0xff]
    %v628 = vld [vmem:[%s3 + $0x8] sm:$0xff]
    %v629 = vld [vmem:[%s3 + $0x10] sm:$0xff]
    %v630 = vld [vmem:[%s3 + $0x18] sm:$0xff]
    %v631 = vld [vmem:[%s3 + $0x20] sm:$0xff]
    %v632 = vld [vmem:[%s3 + $0x28] sm:$0xff]
    %v633 = vld [vmem:[%s3 + $0x30] sm:$0xff]
    %v634 = vld [vmem:[%s3 + $0x38] sm:$0xff]
    %v635 = vld [vmem:[%s5] sm:$0x1]
    %v636 = vperm.slane %v635, 0
    %v638 = vsel %vm582, %v622, 0
    %v641 = vsel %vm582, %v625, 0
    %643 = vmatpush.msra.mxu0 0.0
    %644 = vmatpush.msra.mxu0 0.0
    %645 = vmatpush.msra.mxu0 0.0
    %646 = vmatpush.msra.mxu0 0.0
    %647 = vmatpush.msra.mxu0 0.0
    %648 = vmatpush.msra.mxu0 0.0
    %649 = vmatpush.msra.mxu0 0.0
    %650 = vmatpush.msra.mxu0 0.0
    %651 = vmatpush.msra.mxu0 %v634
    %652 = vmatpush.msra.mxu0 %v633
    %653 = vmatpush.msra.mxu0 %v632
    %654 = vmatpush.msra.mxu0 %v631
    %655 = vmatpush.msra.mxu0 %v630
    %656 = vmatpush.msra.mxu0 %v629
    %657 = vmatpush.msra.mxu0 %v628
    %658 = vmatpush.msra.mxu0 %v627
    %659 = vmatmul.f32.gmra.mxu0 %v638
    %v660 = vpop.f32.mrf.mxu0
    %v661 = vadd.f32 %v636, %v660
    %662 = vmatmul.f32.gmra.mxu0 %v641
    %v663 = vpop.f32.mrf.mxu0
    %v664 = vadd.f32 %v636, %v663
    %665 = vdwg.mxu0
    %v666 = vld [vmem:[%s4] sm:$0xff]
    %v667 = vld [vmem:[%s4 + $0x8] sm:$0xff]
    %v668 = vld [vmem:[%s4 + $0x10] sm:$0xff]
    %v669 = vld [vmem:[%s4 + $0x18] sm:$0xff]
    %v670 = vld [vmem:[%s5 + $0x1] sm:$0x1]
    %v671 = vperm.slane %v670, 0
    %v673 = vsel %vm44, 0.0, 0
    %675 = vmatpush.msra.mxu0 0.0
    %676 = vmatpush.msra.mxu0 0.0
    %677 = vmatpush.msra.mxu0 0.0
    %678 = vmatpush.msra.mxu0 0.0
    %679 = vmatpush.msra.mxu0 0.0
    %680 = vmatpush.msra.mxu0 0.0
    %681 = vmatpush.msra.mxu0 0.0
    %682 = vmatpush.msra.mxu0 0.0
    %683 = vmatpush.msra.mxu0 0.0
    %684 = vmatpush.msra.mxu0 0.0
    %685 = vmatpush.msra.mxu0 0.0
    %686 = vmatpush.msra.mxu0 0.0
    %687 = vmatpush.msra.mxu0 %v669
    %688 = vmatpush.msra.mxu0 %v668
    %689 = vmatpush.msra.mxu0 %v667
    %690 = vmatpush.msra.mxu0 %v666
    %691 = vmatmul.f32.gmra.mxu0 %v673
    %v692 = vpop.f32.mrf.mxu0
    %v693 = vadd.f32 %v671, %v692
    %694 = vdwg.mxu0
    %v696 = vrot.slane %v693, 2
    %v698 = vadd.f32 %v664, %v696
    %v699 = vxor.u32 %v698, 2147483648
    %v700 = vmul.f32 %v699, 1.442695
    %v701 = vpow.pop %v700
    %v702 = vadd.f32 %v701, 1.0
    %v703 = vrcp.pop %v702
    %v704 = vmul.f32 %v702, %v703
    %v705 = vsub.f32 1.0, %v704
    %v706 = vmul.f32 %v703, %v705
    %v707 = vadd.f32 %v703, %v706
    %vm708 = vweird.f32 %v702
    %vm709 = vweird.f32 %v703
    %vm710 = vmor %vm708, %vm709
    %v711 = vsel %vm710, %v703, %v707
    %v712 = vand.u32 2147483647, %v702
    %vm713 = vcmp.eq.f32.partialorder %v712, 8.507059e+37
    %v714 = vand.u32 %v702, 2147483648
    %v715 = vor.u32 1.1754944e-38, %v714
    %v716 = vsel %vm713, %v715, %v711
    %v717 = vmul.f32 1.0, %v716
    %718 = vrot.lane.b32.xlu0 %v696, 64
    %v719 = vpop.permute.xlu0 %718
    %v721 = vmul.f32 %v717, %v719
    %723 = vrot.lane.b32.xlu0 %v721, 64
    %v724 = vpop.permute.xlu0 %723
    %v726 = vadd.f32 %v664, %v724
    %v727 = vtanh.pop %v726
    %v728 = vsub.f32 1.0, %v717
    %730 = vrot.lane.b32.xlu0 %v727, 96
    %v731 = vpop.permute.xlu0 %730
    %v733 = vmul.f32 %v728, %v731
    %v734 = vmul.f32 %v717, 0.0
    %v735 = vadd.f32 %v733, %v734
    %v737 = vrot.slane %v735, 6
    %738 = vrot.lane.b32.xlu0 %v737, 96
    %v739 = vpop.permute.xlu0 %738
    %v740 = vsel %vm44, %v739, 0
    %742 = vmatpush.msra.mxu0 0.0
    %743 = vmatpush.msra.mxu0 0.0
    %744 = vmatpush.msra.mxu0 0.0
    %745 = vmatpush.msra.mxu0 0.0
    %746 = vmatpush.msra.mxu0 0.0
    %747 = vmatpush.msra.mxu0 0.0
    %748 = vmatpush.msra.mxu0 0.0
    %749 = vmatpush.msra.mxu0 0.0
    %750 = vmatpush.msra.mxu0 0.0
    %751 = vmatpush.msra.mxu0 0.0
    %752 = vmatpush.msra.mxu0 0.0
    %753 = vmatpush.msra.mxu0 0.0
    %754 = vmatpush.msra.mxu0 %v669
    %755 = vmatpush.msra.mxu0 %v668
    %756 = vmatpush.msra.mxu0 %v667
    %757 = vmatpush.msra.mxu0 %v666
    %758 = vmatmul.f32.gmra.mxu0 %v740
    %v759 = vpop.f32.mrf.mxu0
    %v760 = vadd.f32 %v671, %v759
    %761 = vdwg.mxu0
    %v763 = vrot.slane %v760, 4
    %v765 = vadd.f32 %v664, %v763
    %v766 = vxor.u32 %v765, 2147483648
    %v767 = vmul.f32 %v766, 1.442695
    %v768 = vpow.pop %v767
    %v769 = vadd.f32 %v768, 1.0
    %v770 = vrcp.pop %v769
    %v771 = vmul.f32 %v769, %v770
    %v772 = vsub.f32 1.0, %v771
    %v773 = vmul.f32 %v770, %v772
    %v774 = vadd.f32 %v770, %v773
    %vm775 = vweird.f32 %v769
    %vm776 = vweird.f32 %v770
    %vm777 = vmor %vm775, %vm776
    %v778 = vsel %vm777, %v770, %v774
    %v779 = vand.u32 2147483647, %v769
    %vm780 = vcmp.eq.f32.partialorder %v779, 8.507059e+37
    %v781 = vand.u32 %v769, 2147483648
    %v782 = vor.u32 1.1754944e-38, %v781
    %v783 = vsel %vm780, %v782, %v778
    %v784 = vmul.f32 1.0, %v783
    %785 = vrot.lane.b32.xlu0 %v763, 64
    %v786 = vpop.permute.xlu0 %785
    %v788 = vmul.f32 %v784, %v786
    %790 = vrot.lane.b32.xlu0 %v788, 64
    %v791 = vpop.permute.xlu0 %790
    %v793 = vadd.f32 %v664, %v791
    %v794 = vtanh.pop %v793
    %v795 = vsub.f32 1.0, %v784
    %797 = vrot.lane.b32.xlu0 %v794, 96
    %v798 = vpop.permute.xlu0 %797
    %v800 = vmul.f32 %v795, %v798
    %v801 = vrot.slane %v735, 2
    %v803 = vmul.f32 %v784, %v801
    %v804 = vadd.f32 %v800, %v803
    %v806 = vrot.slane %v804, 4
    %807 = vrot.lane.b32.xlu0 %v806, 96
    %v808 = vpop.permute.xlu0 %807
    %v809 = vsel %vm44, %v808, 0
    %811 = vmatpush.msra.mxu0 0.0
    %812 = vmatpush.msra.mxu0 0.0
    %813 = vmatpush.msra.mxu0 0.0
    %814 = vmatpush.msra.mxu0 0.0
    %815 = vmatpush.msra.mxu0 0.0
    %816 = vmatpush.msra.mxu0 0.0
    %817 = vmatpush.msra.mxu0 0.0
    %818 = vmatpush.msra.mxu0 0.0
    %819 = vmatpush.msra.mxu0 0.0
    %820 = vmatpush.msra.mxu0 0.0
    %821 = vmatpush.msra.mxu0 0.0
    %822 = vmatpush.msra.mxu0 0.0
    %823 = vmatpush.msra.mxu0 %v669
    %824 = vmatpush.msra.mxu0 %v668
    %825 = vmatpush.msra.mxu0 %v667
    %826 = vmatpush.msra.mxu0 %v666
    %827 = vmatmul.f32.gmra.mxu0 %v809
    %v828 = vpop.f32.mrf.mxu0
    %v829 = vadd.f32 %v671, %v828
    %830 = vdwg.mxu0
    %v832 = vrot.slane %v829, 6
    %v834 = vadd.f32 %v664, %v832
    %v835 = vxor.u32 %v834, 2147483648
    %v836 = vmul.f32 %v835, 1.442695
    %v837 = vpow.pop %v836
    %v838 = vadd.f32 %v837, 1.0
    %v839 = vrcp.pop %v838
    %v840 = vmul.f32 %v838, %v839
    %v841 = vsub.f32 1.0, %v840
    %v842 = vmul.f32 %v839, %v841
    %v843 = vadd.f32 %v839, %v842
    %vm844 = vweird.f32 %v838
    %vm845 = vweird.f32 %v839
    %vm846 = vmor %vm844, %vm845
    %v847 = vsel %vm846, %v839, %v843
    %v848 = vand.u32 2147483647, %v838
    %vm849 = vcmp.eq.f32.partialorder %v848, 8.507059e+37
    %v850 = vand.u32 %v838, 2147483648
    %v851 = vor.u32 1.1754944e-38, %v850
    %v852 = vsel %vm849, %v851, %v847
    %v853 = vmul.f32 1.0, %v852
    %854 = vrot.lane.b32.xlu0 %v832, 64
    %v855 = vpop.permute.xlu0 %854
    %v857 = vmul.f32 %v853, %v855
    %859 = vrot.lane.b32.xlu0 %v857, 64
    %v860 = vpop.permute.xlu0 %859
    %v862 = vadd.f32 %v664, %v860
    %v863 = vtanh.pop %v862
    %v864 = vsub.f32 1.0, %v853
    %866 = vrot.lane.b32.xlu0 %v863, 96
    %v867 = vpop.permute.xlu0 %866
    %v869 = vmul.f32 %v864, %v867
    %v870 = vrot.slane %v804, 2
    %v872 = vmul.f32 %v853, %v870
    %v873 = vadd.f32 %v869, %v872
    %v875 = vrot.slane %v873, 2
    %876 = vrot.lane.b32.xlu0 %v875, 96
    %v877 = vpop.permute.xlu0 %876
    %v878 = vsel %vm44, %v877, 0
    %880 = vmatpush.msra.mxu0 0.0
    %881 = vmatpush.msra.mxu0 0.0
    %882 = vmatpush.msra.mxu0 0.0
    %883 = vmatpush.msra.mxu0 0.0
    %884 = vmatpush.msra.mxu0 0.0
    %885 = vmatpush.msra.mxu0 0.0
    %886 = vmatpush.msra.mxu0 0.0
    %887 = vmatpush.msra.mxu0 0.0
    %888 = vmatpush.msra.mxu0 0.0
    %889 = vmatpush.msra.mxu0 0.0
    %890 = vmatpush.msra.mxu0 0.0
    %891 = vmatpush.msra.mxu0 0.0
    %892 = vmatpush.msra.mxu0 %v669
    %893 = vmatpush.msra.mxu0 %v668
    %894 = vmatpush.msra.mxu0 %v667
    %895 = vmatpush.msra.mxu0 %v666
    %896 = vmatmul.f32.gmra.mxu0 %v878
    %v897 = vpop.f32.mrf.mxu0
    %v898 = vadd.f32 %v671, %v897
    %899 = vdwg.mxu0
    %v900 = vadd.f32 %v664, %v898
    %v901 = vxor.u32 %v900, 2147483648
    %v902 = vmul.f32 %v901, 1.442695
    %v903 = vpow.pop %v902
    %v904 = vadd.f32 %v903, 1.0
    %v905 = vrcp.pop %v904
    %v906 = vmul.f32 %v904, %v905
    %v907 = vsub.f32 1.0, %v906
    %v908 = vmul.f32 %v905, %v907
    %v909 = vadd.f32 %v905, %v908
    %vm910 = vweird.f32 %v904
    %vm911 = vweird.f32 %v905
    %vm912 = vmor %vm910, %vm911
    %v913 = vsel %vm912, %v905, %v909
    %v914 = vand.u32 2147483647, %v904
    %vm915 = vcmp.eq.f32.partialorder %v914, 8.507059e+37
    %v916 = vand.u32 %v904, 2147483648
    %v917 = vor.u32 1.1754944e-38, %v916
    %v918 = vsel %vm915, %v917, %v913
    %v919 = vmul.f32 1.0, %v918
    %921 = vrot.lane.b32.xlu0 %v898, 64
    %v922 = vpop.permute.xlu0 %921
    %v924 = vmul.f32 %v919, %v922
    %926 = vrot.lane.b32.xlu0 %v924, 64
    %v927 = vpop.permute.xlu0 %926
    %v929 = vadd.f32 %v664, %v927
    %v930 = vtanh.pop %v929
    %v931 = vsub.f32 1.0, %v919
    %933 = vrot.lane.b32.xlu0 %v930, 96
    %v934 = vpop.permute.xlu0 %933
    %v936 = vmul.f32 %v931, %v934
    %v938 = vmul.f32 %v919, %v875
    %v939 = vadd.f32 %v936, %v938
    %941 = vrot.lane.b32.xlu0 %v939, 96
    %v942 = vpop.permute.xlu0 %941
    %v943 = vsel %vm44, %v942, 0
    %945 = vmatpush.msra.mxu0 0.0
    %946 = vmatpush.msra.mxu0 0.0
    %947 = vmatpush.msra.mxu0 0.0
    %948 = vmatpush.msra.mxu0 0.0
    %949 = vmatpush.msra.mxu0 0.0
    %950 = vmatpush.msra.mxu0 0.0
    %951 = vmatpush.msra.mxu0 0.0
    %952 = vmatpush.msra.mxu0 0.0
    %953 = vmatpush.msra.mxu0 0.0
    %954 = vmatpush.msra.mxu0 0.0
    %955 = vmatpush.msra.mxu0 0.0
    %956 = vmatpush.msra.mxu0 0.0
    %957 = vmatpush.msra.mxu0 %v669
    %958 = vmatpush.msra.mxu0 %v668
    %959 = vmatpush.msra.mxu0 %v667
    %960 = vmatpush.msra.mxu0 %v666
    %961 = vmatmul.f32.gmra.mxu0 %v943
    %v962 = vpop.f32.mrf.mxu0
    %v963 = vadd.f32 %v671, %v962
    %964 = vdwg.mxu0
    %v966 = vrot.slane %v963, 2
    %v968 = vadd.f32 %v661, %v966
    %v969 = vxor.u32 %v968, 2147483648
    %v970 = vmul.f32 %v969, 1.442695
    %v971 = vpow.pop %v970
    %v972 = vadd.f32 %v971, 1.0
    %v973 = vrcp.pop %v972
    %v974 = vmul.f32 %v972, %v973
    %v975 = vsub.f32 1.0, %v974
    %v976 = vmul.f32 %v973, %v975
    %v977 = vadd.f32 %v973, %v976
    %vm978 = vweird.f32 %v972
    %vm979 = vweird.f32 %v973
    %vm980 = vmor %vm978, %vm979
    %v981 = vsel %vm980, %v973, %v977
    %v982 = vand.u32 2147483647, %v972
    %vm983 = vcmp.eq.f32.partialorder %v982, 8.507059e+37
    %v984 = vand.u32 %v972, 2147483648
    %v985 = vor.u32 1.1754944e-38, %v984
    %v986 = vsel %vm983, %v985, %v981
    %v987 = vmul.f32 1.0, %v986
    %988 = vrot.lane.b32.xlu0 %v966, 64
    %v989 = vpop.permute.xlu0 %988
    %v991 = vmul.f32 %v987, %v989
    %993 = vrot.lane.b32.xlu0 %v991, 64
    %v994 = vpop.permute.xlu0 %993
    %v996 = vadd.f32 %v661, %v994
    %v997 = vtanh.pop %v996
    %v998 = vsub.f32 1.0, %v987
    %1000 = vrot.lane.b32.xlu0 %v997, 96
    %v1001 = vpop.permute.xlu0 %1000
    %v1003 = vmul.f32 %v998, %v1001
    %v1004 = vrot.slane %v939, 2
    %v1006 = vmul.f32 %v987, %v1004
    %v1007 = vadd.f32 %v1003, %v1006
    %v1009 = vrot.slane %v1007, 6
    %1010 = vrot.lane.b32.xlu0 %v1009, 96
    %v1011 = vpop.permute.xlu0 %1010
    %v1012 = vsel %vm44, %v1011, 0
    %1014 = vmatpush.msra.mxu0 0.0
    %1015 = vmatpush.msra.mxu0 0.0
    %1016 = vmatpush.msra.mxu0 0.0
    %1017 = vmatpush.msra.mxu0 0.0
    %1018 = vmatpush.msra.mxu0 0.0
    %1019 = vmatpush.msra.mxu0 0.0
    %1020 = vmatpush.msra.mxu0 0.0
    %1021 = vmatpush.msra.mxu0 0.0
    %1022 = vmatpush.msra.mxu0 0.0
    %1023 = vmatpush.msra.mxu0 0.0
    %1024 = vmatpush.msra.mxu0 0.0
    %1025 = vmatpush.msra.mxu0 0.0
    %1026 = vmatpush.msra.mxu0 %v669
    %1027 = vmatpush.msra.mxu0 %v668
    %1028 = vmatpush.msra.mxu0 %v667
    %1029 = vmatpush.msra.mxu0 %v666
    %1030 = vmatmul.f32.gmra.mxu0 %v1012
    %v1031 = vpop.f32.mrf.mxu0
    %v1032 = vadd.f32 %v671, %v1031
    %1033 = vdwg.mxu0
    %v1035 = vrot.slane %v1032, 4
    %v1037 = vadd.f32 %v661, %v1035
    %v1038 = vxor.u32 %v1037, 2147483648
    %v1039 = vmul.f32 %v1038, 1.442695
    %v1040 = vpow.pop %v1039
    %v1041 = vadd.f32 %v1040, 1.0
    %v1042 = vrcp.pop %v1041
    %v1043 = vmul.f32 %v1041, %v1042
    %v1044 = vsub.f32 1.0, %v1043
    %v1045 = vmul.f32 %v1042, %v1044
    %v1046 = vadd.f32 %v1042, %v1045
    %vm1047 = vweird.f32 %v1041
    %vm1048 = vweird.f32 %v1042
    %vm1049 = vmor %vm1047, %vm1048
    %v1050 = vsel %vm1049, %v1042, %v1046
    %v1051 = vand.u32 2147483647, %v1041
    %vm1052 = vcmp.eq.f32.partialorder %v1051, 8.507059e+37
    %v1053 = vand.u32 %v1041, 2147483648
    %v1054 = vor.u32 1.1754944e-38, %v1053
    %v1055 = vsel %vm1052, %v1054, %v1050
    %v1056 = vmul.f32 1.0, %v1055
    %1057 = vrot.lane.b32.xlu0 %v1035, 64
    %v1058 = vpop.permute.xlu0 %1057
    %v1060 = vmul.f32 %v1056, %v1058
    %1062 = vrot.lane.b32.xlu0 %v1060, 64
    %v1063 = vpop.permute.xlu0 %1062
    %v1065 = vadd.f32 %v661, %v1063
    %v1066 = vtanh.pop %v1065
    %v1067 = vsub.f32 1.0, %v1056
    %1069 = vrot.lane.b32.xlu0 %v1066, 96
    %v1070 = vpop.permute.xlu0 %1069
    %v1072 = vmul.f32 %v1067, %v1070
    %v1073 = vrot.slane %v1007, 2
    %v1075 = vmul.f32 %v1056, %v1073
    %v1076 = vadd.f32 %v1072, %v1075
    %v1078 = vrot.slane %v1076, 4
    %1079 = vrot.lane.b32.xlu0 %v1078, 96
    %v1080 = vpop.permute.xlu0 %1079
    %v1081 = vsel %vm44, %v1080, 0
    %1083 = vmatpush.msra.mxu0 0.0
    %1084 = vmatpush.msra.mxu0 0.0
    %1085 = vmatpush.msra.mxu0 0.0
    %1086 = vmatpush.msra.mxu0 0.0
    %1087 = vmatpush.msra.mxu0 0.0
    %1088 = vmatpush.msra.mxu0 0.0
    %1089 = vmatpush.msra.mxu0 0.0
    %1090 = vmatpush.msra.mxu0 0.0
    %1091 = vmatpush.msra.mxu0 0.0
    %1092 = vmatpush.msra.mxu0 0.0
    %1093 = vmatpush.msra.mxu0 0.0
    %1094 = vmatpush.msra.mxu0 0.0
    %1095 = vmatpush.msra.mxu0 %v669
    %1096 = vmatpush.msra.mxu0 %v668
    %1097 = vmatpush.msra.mxu0 %v667
    %1098 = vmatpush.msra.mxu0 %v666
    %1099 = vmatmul.f32.gmra.mxu0 %v1081
    %v1100 = vpop.f32.mrf.mxu0
    %v1101 = vadd.f32 %v671, %v1100
    %1102 = vdwg.mxu0
    %v1104 = vrot.slane %v1101, 6
    %v1106 = vadd.f32 %v661, %v1104
    %v1107 = vxor.u32 %v1106, 2147483648
    %v1108 = vmul.f32 %v1107, 1.442695
    %v1109 = vpow.pop %v1108
    %v1110 = vadd.f32 %v1109, 1.0
    %v1111 = vrcp.pop %v1110
    %v1112 = vmul.f32 %v1110, %v1111
    %v1113 = vsub.f32 1.0, %v1112
    %v1114 = vmul.f32 %v1111, %v1113
    %v1115 = vadd.f32 %v1111, %v1114
    %vm1116 = vweird.f32 %v1110
    %vm1117 = vweird.f32 %v1111
    %vm1118 = vmor %vm1116, %vm1117
    %v1119 = vsel %vm1118, %v1111, %v1115
    %v1120 = vand.u32 2147483647, %v1110
    %vm1121 = vcmp.eq.f32.partialorder %v1120, 8.507059e+37
    %v1122 = vand.u32 %v1110, 2147483648
    %v1123 = vor.u32 1.1754944e-38, %v1122
    %v1124 = vsel %vm1121, %v1123, %v1119
    %v1125 = vmul.f32 1.0, %v1124
    %1126 = vrot.lane.b32.xlu0 %v1104, 64
    %v1127 = vpop.permute.xlu0 %1126
    %v1129 = vmul.f32 %v1125, %v1127
    %1131 = vrot.lane.b32.xlu0 %v1129, 64
    %v1132 = vpop.permute.xlu0 %1131
    %v1134 = vadd.f32 %v661, %v1132
    %v1135 = vtanh.pop %v1134
    %v1136 = vsub.f32 1.0, %v1125
    %1138 = vrot.lane.b32.xlu0 %v1135, 96
    %v1139 = vpop.permute.xlu0 %1138
    %v1141 = vmul.f32 %v1136, %v1139
    %v1142 = vrot.slane %v1076, 2
    %v1144 = vmul.f32 %v1125, %v1142
    %v1145 = vadd.f32 %v1141, %v1144
    %v1147 = vrot.slane %v1145, 2
    %1148 = vrot.lane.b32.xlu0 %v1147, 96
    %v1149 = vpop.permute.xlu0 %1148
    %v1150 = vsel %vm44, %v1149, 0
    %1152 = vmatpush.msra.mxu0 0.0
    %1153 = vmatpush.msra.mxu0 0.0
    %1154 = vmatpush.msra.mxu0 0.0
    %1155 = vmatpush.msra.mxu0 0.0
    %1156 = vmatpush.msra.mxu0 0.0
    %1157 = vmatpush.msra.mxu0 0.0
    %1158 = vmatpush.msra.mxu0 0.0
    %1159 = vmatpush.msra.mxu0 0.0
    %1160 = vmatpush.msra.mxu0 0.0
    %1161 = vmatpush.msra.mxu0 0.0
    %1162 = vmatpush.msra.mxu0 0.0
    %1163 = vmatpush.msra.mxu0 0.0
    %1164 = vmatpush.msra.mxu0 %v669
    %1165 = vmatpush.msra.mxu0 %v668
    %1166 = vmatpush.msra.mxu0 %v667
    %1167 = vmatpush.msra.mxu0 %v666
    %1168 = vmatmul.f32.gmra.mxu0 %v1150
    %v1169 = vpop.f32.mrf.mxu0
    %v1170 = vadd.f32 %v671, %v1169
    %1171 = vdwg.mxu0
    %v1172 = vadd.f32 %v661, %v1170
    %v1173 = vxor.u32 %v1172, 2147483648
    %v1174 = vmul.f32 %v1173, 1.442695
    %v1175 = vpow.pop %v1174
    %v1176 = vadd.f32 %v1175, 1.0
    %v1177 = vrcp.pop %v1176
    %v1178 = vmul.f32 %v1176, %v1177
    %v1179 = vsub.f32 1.0, %v1178
    %v1180 = vmul.f32 %v1177, %v1179
    %v1181 = vadd.f32 %v1177, %v1180
    %vm1182 = vweird.f32 %v1176
    %vm1183 = vweird.f32 %v1177
    %vm1184 = vmor %vm1182, %vm1183
    %v1185 = vsel %vm1184, %v1177, %v1181
    %v1186 = vand.u32 2147483647, %v1176
    %vm1187 = vcmp.eq.f32.partialorder %v1186, 8.507059e+37
    %v1188 = vand.u32 %v1176, 2147483648
    %v1189 = vor.u32 1.1754944e-38, %v1188
    %v1190 = vsel %vm1187, %v1189, %v1185
    %v1191 = vmul.f32 1.0, %v1190
    %1193 = vrot.lane.b32.xlu0 %v1170, 64
    %v1194 = vpop.permute.xlu0 %1193
    %v1196 = vmul.f32 %v1191, %v1194
    %1198 = vrot.lane.b32.xlu0 %v1196, 64
    %v1199 = vpop.permute.xlu0 %1198
    %v1201 = vadd.f32 %v661, %v1199
    %v1202 = vtanh.pop %v1201
    %v1203 = vsub.f32 1.0, %v1191
    %1205 = vrot.lane.b32.xlu0 %v1202, 96
    %v1206 = vpop.permute.xlu0 %1205
    %v1208 = vmul.f32 %v1203, %v1206
    %v1210 = vmul.f32 %v1191, %v1147
    %v1211 = vadd.f32 %v1208, %v1210
    %v1212 = vld [vmem:[%s6] sm:$0xff]
    %v1213 = vld [vmem:[%s6 + $0x8] sm:$0xff]
    %v1214 = vld [vmem:[%s6 + $0x10] sm:$0xff]
    %v1215 = vld [vmem:[%s6 + $0x18] sm:$0xff]
    %v1216 = vld [vmem:[%s7] sm:$0x1]
    %v1218 = vperm.slane %v1216, 0
    %1221 = vrot.lane.b32.xlu0 %v1211, 96
    %v1222 = vpop.permute.xlu0 %1221
    %v1223 = vsel %vm44, %v1222, 0
    %1225 = vmatpush.msra.mxu0 0.0
    %1226 = vmatpush.msra.mxu0 0.0
    %1227 = vmatpush.msra.mxu0 0.0
    %1228 = vmatpush.msra.mxu0 0.0
    %1229 = vmatpush.msra.mxu0 0.0
    %1230 = vmatpush.msra.mxu0 0.0
    %1231 = vmatpush.msra.mxu0 0.0
    %1232 = vmatpush.msra.mxu0 0.0
    %1233 = vmatpush.msra.mxu0 0.0
    %1234 = vmatpush.msra.mxu0 0.0
    %1235 = vmatpush.msra.mxu0 0.0
    %1236 = vmatpush.msra.mxu0 0.0
    %1237 = vmatpush.msra.mxu0 %v1215
    %1238 = vmatpush.msra.mxu0 %v1214
    %1239 = vmatpush.msra.mxu0 %v1213
    %1240 = vmatpush.msra.mxu0 %v1212
    %1241 = vmatmul.f32.gmra.mxu0 %v1223
    %v1242 = vpop.f32.mrf.mxu0
    %v1243 = vadd.f32 %v1218, %v1242
    %1244 = vdwg.mxu0
    %vm1245 = vcmask 33792
    %v1246 = vsel %vm1245, %v1243, -inf
    %1247 = vmax.xlane.f32.xlu0 %v1246
    %v1248 = vpop.xlane.xlu0 %1247
    %v1249 = vsub.f32 %v1243, %v1248
    %v1250 = vmul.f32 %v1249, 1.442695
    %v1251 = vpow.pop %v1250
    %v1252 = vsel %vm1245, %v1251, 0.0
    %1253 = vadd.xlane.f32.xlu0 %v1252
    %v1254 = vpop.xlane.xlu0 %1253
    %v1255 = vlog2.pop %v1254
    %v1256 = vmul.f32 %v1255, 0.6931472
    %v1257 = vadd.f32 %v1248, %v1256
    %v1258 = vsub.f32 %v1243, %v1257
    %1259 = vst.msk [vmem:[#allocation2] sm:$0x3] %vm1245, %v1258
    // Predicated region
    $region34: #{tpu_custom_call.1} parent=1 // pred_check
      _
    $region35: #{tpu_custom_call.1} parent=1 // pred_check_branch
      %1261 = sbr.rel (0) target = $region37
    $region36: #{tpu_custom_call.1} parent=1 // pred_region
      %1263 = vsyncadd [#allocation3], 0
      %s1265 = sshll.u32 [#allocation2], 4
      %s1266 = int_to_ptr.vmem [resolvable:$true] %s1265
      %s1267 = sshll.u32 %s8, 4
      %s1268 = int_to_ptr.hbm [resolvable:$true] %s1267
      %1270 = dma.vmem_to_hbm [thread:$0]  %s1266, 32, %s1268, [#allocation3]
    $region37: #{tpu_custom_call.1} parent=1 // pred_fallthru
      _
    // Predicated region
    $region38: #{tpu_custom_call.1} parent=1 // pred_check
      _
    $region39: #{tpu_custom_call.1} parent=1 // pred_check_branch
      %1272 = sbr.rel (0) target = $region41
    $region40: #{tpu_custom_call.1} parent=1 // pred_region
      %1274 = dma.done [#allocation3], 32
    $region41: #{tpu_custom_call.1} parent=1 // pred_fallthru
      _
    %1275 = vsyncpa [#allocation3], 1

</llo_original>
